<compile_context>
chip_gen: v6e
topology: v6e:2x2x1
jax: 0.10.0
libtpu: 0.0.40
codegen_flags: <defaults>
</compile_context>

<pallas_src>
import jax
import jax.numpy as jnp
from jax.experimental import pallas as pl
from jax.experimental.pallas import tpu as pltpu

IN_FEATURES = 28 * 28   # 784
HIDDEN = 390
OUT_FEATURES = 10


def netfull_kernel(x_ref, w1_ref, b1_ref, w2_ref, b2_ref, o_ref):
    # In-kernel f32 -> bf16 cast of the activation stream (avoids a separate
    # HBM convert pass in the wrapper).
    x = x_ref[...].astype(jnp.bfloat16)

    # Hidden layer: bf16 operands, f32 MXU accumulation, f32 bias + tanh.
    h = jnp.tanh(
        jnp.dot(x, w1_ref[...], preferred_element_type=jnp.float32)
        + b1_ref[...]
    )

    # Output layer logits (lane-padded to 128 columns). Padded W2 columns are
    # zero and padded b2 entries are -1e30, so padded logits are ~-1e30.
    logits = (
        jnp.dot(h.astype(jnp.bfloat16), w2_ref[...],
                preferred_element_type=jnp.float32)
        + b2_ref[...]
    )

    # Numerically stable log_softmax over the last axis, all in f32. Padded
    # columns never win the max and exp(-1e30 - m) underflows to exactly 0,
    # so the real 10 columns are identical to the unpadded computation.
    m = jnp.max(logits, axis=-1, keepdims=True)
    shifted = logits - m
    lse = jnp.log(jnp.sum(jnp.exp(shifted), axis=-1, keepdims=True))
    o_ref[...] = (shifted - lse).astype(o_ref.dtype)


def _round_up(x, m):
    return ((x + m - 1) // m) * m


def _choose_tb(B, tb_max=2048):
    """Pick the batch tile.

    Small batches: one full-batch tile (block dim == array dim, always legal).
    Larger batches: multiple of 256, capped at tb_max, and capped at ~ceil(B/2)
    so the grid keeps >= 2 steps (keeps both v7x TensorCores busy)."""
    if B <= 256:
        return B
    half = _round_up(pl.cdiv(B, 2), 256)
    return min(tb_max, half)


def netfull_forward(x, w1, b1, w2, b2, *, tb_max=2048):
    """x: [B, 1, 28, 28] or [B, 784] (any float dtype). Weights stored as
    [in, out]. Returns [B, 10] f32 log-probabilities."""
    B = x.shape[0]
    IN, HID = w1.shape       # (784, 390)
    _, OUT = w2.shape        # (390, 10)

    # Flatten (matches torch x.view(x.size(0), -1)); keep native dtype — the
    # bf16 cast happens inside the kernel.
    x2d = x.reshape(B, -1)

    TB = _choose_tb(B, tb_max)
    grid = (pl.cdiv(B, TB),)     # ragged tail handled by masked block DMA

    # Weights: bf16, VMEM-resident. Lane-pad the output path 10 -> 128:
    # zero-pad W2 columns; padded b2 entries get -1e30 so they are excluded
    # from max/exp/sum inside the kernel.
    OUT_PAD = _round_up(OUT, 128)
    w1b = w1.astype(jnp.bfloat16)
    w2b = jnp.zeros((HID, OUT_PAD), jnp.bfloat16).at[:, :OUT].set(
        w2.astype(jnp.bfloat16))
    b1p = b1.reshape(1, HID).astype(jnp.float32)
    b2p = jnp.full((1, OUT_PAD), -1e30, jnp.float32).at[0, :OUT].set(
        b2.astype(jnp.float32))

    cost = pl.CostEstimate(
        flops=2 * B * (IN * HID + HID * OUT_PAD),
        transcendentals=B * (HID + OUT_PAD),
        bytes_accessed=(B * IN * x2d.dtype.itemsize       # activations in
                        + IN * HID * 2 + HID * OUT_PAD * 2  # bf16 weights
                        + (HID + OUT_PAD) * 4               # f32 biases
                        + B * OUT_PAD * 4),                 # f32 output
    )

    out = pl.pallas_call(
        netfull_kernel,
        out_shape=jax.ShapeDtypeStruct((B, OUT_PAD), jnp.float32),
        grid=grid,
        in_specs=[
            pl.BlockSpec((TB, IN), lambda i: (i, 0)),        # x: batch-tiled
            pl.BlockSpec((IN, HID), lambda i: (0, 0)),       # W1: resident
            pl.BlockSpec((1, HID), lambda i: (0, 0)),        # b1
            pl.BlockSpec((HID, OUT_PAD), lambda i: (0, 0)),  # W2 (padded)
            pl.BlockSpec((1, OUT_PAD), lambda i: (0, 0)),    # b2 (padded)
        ],
        out_specs=pl.BlockSpec((TB, OUT_PAD), lambda i: (i, 0)),
        compiler_params=pltpu.CompilerParams(
            # Megacore sharding of the batch axis on v7x (no-op v5e/v6e).
            # TODO(synk): if profiling shows one v7x TC idle, switch to
            # pltpu.CORE_PARALLEL.
            dimension_semantics=("parallel",),
            vmem_limit_bytes=48 * 1024 * 1024,
        ),
        cost_estimate=cost,
    )(x2d, w1b, b1p, w2b, b2p)

    return out[:, :OUT]


def init_params(key):
    """Deterministic init mimicking nn.Linear (torch stores [out, in]; we
    store the transpose [in, out])."""
    k1, k2, k3, k4 = jax.random.split(key, 4)
    in1, out1 = IN_FEATURES, HIDDEN
    in2, out2 = HIDDEN, OUT_FEATURES
    bound1 = 1.0 / (in1 ** 0.5)
    bound2 = 1.0 / (in2 ** 0.5)
    w1 = jax.random.uniform(k1, (in1, out1), jnp.float32, -bound1, bound1)
    b1 = jax.random.uniform(k2, (out1,), jnp.float32, -bound1, bound1)
    w2 = jax.random.uniform(k3, (in2, out2), jnp.float32, -bound2, bound2)
    b2 = jax.random.uniform(k4, (out2,), jnp.float32, -bound2, bound2)
    return w1, b1, w2, b2


def reference_forward_matched(x, w1, b1, w2, b2):
    """Pure-JAX reference with the SAME bf16-operand / f32-accumulate math as
    the kernel (validates the kernel implementation)."""
    x2d = x.reshape(x.shape[0], -1).astype(jnp.bfloat16)
    h = jnp.tanh(
        jnp.dot(x2d, w1.astype(jnp.bfloat16),
                preferred_element_type=jnp.float32) + b1.astype(jnp.float32)
    )
    logits = jnp.dot(h.astype(jnp.bfloat16), w2.astype(jnp.bfloat16),
                     preferred_element_type=jnp.float32) + b2.astype(jnp.float32)
    return jax.nn.log_softmax(logits, axis=1)


def reference_forward_f32(x, w1, b1, w2, b2):
    """Full-f32 reference matching the PyTorch forward semantics."""
    x2d = x.reshape(x.shape[0], -1)
    h = jnp.tanh(x2d @ w1 + b1)
    logits = h @ w2 + b2
    return jax.nn.log_softmax(logits, axis=1)


def _check(B, key):
    kx, kp = jax.random.split(key)
    x = jax.random.normal(kx, (B, 1, 28, 28), jnp.float32)  # NCHW, like torch
    w1, b1, w2, b2 = init_params(kp)

    out = jax.block_until_ready(netfull_forward(x, w1, b1, w2, b2))
    assert out.shape == (B, OUT_FEATURES), out.shape
    assert bool(jnp.all(jnp.isfinite(out))), "non-finite output"

    # Kernel vs bf16-matched pure-JAX reference (same numerics).
    ref_bf16 = reference_forward_matched(x, w1, b1, w2, b2)
    assert jnp.allclose(out, ref_bf16, atol=1e-3, rtol=1e-3), \
        f"B={B}: mismatch vs bf16-matched reference"

    # Looser sanity check vs the full-f32 PyTorch-semantics reference.
    ref_f32 = reference_forward_f32(x, w1, b1, w2, b2)
    assert jnp.allclose(out, ref_f32, atol=5e-2, rtol=5e-2), \
        f"B={B}: mismatch vs f32 reference"


if __name__ == "__main__":
    key = jax.random.PRNGKey(0)
    k0, k1, k2 = jax.random.split(key, 3)

    _check(8, k0)     # small batch, single full-batch tile
    _check(13, k1)    # batch not a multiple of 8 (block dim == array dim)
    _check(300, k2)   # multi-step grid (TB=256) with a ragged masked tail

    print("KERNEL_OK")
</pallas_src>

<mosaic_0001>
module attributes {stable_mosaic.version = 11 : i64} {
  func.func @netfull_kernel(%arg0: i32, %arg1: memref<8x784xf32, #tpu.memory_space<vmem>>, %arg2: memref<784x390xbf16, #tpu.memory_space<vmem>>, %arg3: memref<1x390xf32, #tpu.memory_space<vmem>>, %arg4: memref<390x128xbf16, #tpu.memory_space<vmem>>, %arg5: memref<1x128xf32, #tpu.memory_space<vmem>>, %arg6: memref<8x128xf32, #tpu.memory_space<vmem>>) attributes {dimension_semantics = [#tpu.dimension_semantics<parallel>], iteration_bounds = array<i64: 1>, scalar_prefetch = 0 : i64, scratch_operands = 0 : i64, tpu.core_type = #tpu.core_type<tc>, window_params = [{transform_indices = @transform_0, window_bounds = array<i64: 8, 784>}, {pipeline_mode = #tpu.pipeline_mode<synchronous>, transform_indices = @transform_1, window_bounds = array<i64: 784, 390>}, {pipeline_mode = #tpu.pipeline_mode<synchronous>, transform_indices = @transform_2, window_bounds = array<i64: 1, 390>}, {pipeline_mode = #tpu.pipeline_mode<synchronous>, transform_indices = @transform_3, window_bounds = array<i64: 390, 128>}, {pipeline_mode = #tpu.pipeline_mode<synchronous>, transform_indices = @transform_4, window_bounds = array<i64: 1, 128>}, {transform_indices = @transform_5, window_bounds = array<i64: 8, 128>}]} {
    %c0 = arith.constant 0 : index
    %c0_0 = arith.constant 0 : index
    %0 = vector.load %arg1[%c0, %c0_0] : memref<8x784xf32, #tpu.memory_space<vmem>>, vector<8x784xf32>
    %1 = arith.truncf %0 : vector<8x784xf32> to vector<8x784xbf16>
    %c0_1 = arith.constant 0 : index
    %c0_2 = arith.constant 0 : index
    %2 = vector.load %arg2[%c0_1, %c0_2] : memref<784x390xbf16, #tpu.memory_space<vmem>>, vector<784x390xbf16>
    %cst = arith.constant dense<0.000000e+00> : vector<8x390xf32>
    %3 = tpu.matmul %1, %2, %cst {dimension_numbers = #tpu.dot_dimension_numbers<[1], [0], [0], [1], [0, 0, 1, 1], [], []>} : vector<8x784xbf16>, vector<784x390xbf16>, vector<8x390xf32> -> vector<8x390xf32>
    %c0_3 = arith.constant 0 : index
    %c0_4 = arith.constant 0 : index
    %4 = vector.load %arg3[%c0_3, %c0_4] : memref<1x390xf32, #tpu.memory_space<vmem>>, vector<1x390xf32>
    %5 = vector.broadcast %4 : vector<1x390xf32> to vector<8x390xf32>
    %6 = arith.addf %3, %5 : vector<8x390xf32>
    %7 = math.tanh %6 : vector<8x390xf32>
    %8 = arith.truncf %7 : vector<8x390xf32> to vector<8x390xbf16>
    %c0_5 = arith.constant 0 : index
    %c0_6 = arith.constant 0 : index
    %9 = vector.load %arg4[%c0_5, %c0_6] : memref<390x128xbf16, #tpu.memory_space<vmem>>, vector<390x128xbf16>
    %cst_7 = arith.constant dense<0.000000e+00> : vector<8x128xf32>
    %10 = tpu.matmul %8, %9, %cst_7 {dimension_numbers = #tpu.dot_dimension_numbers<[1], [0], [0], [1], [0, 0, 1, 1], [], []>} : vector<8x390xbf16>, vector<390x128xbf16>, vector<8x128xf32> -> vector<8x128xf32>
    %c0_8 = arith.constant 0 : index
    %c0_9 = arith.constant 0 : index
    %11 = vector.load %arg5[%c0_8, %c0_9] : memref<1x128xf32, #tpu.memory_space<vmem>>, vector<1x128xf32>
    %12 = vector.broadcast %11 : vector<1x128xf32> to vector<8x128xf32>
    %13 = arith.addf %10, %12 : vector<8x128xf32>
    %cst_10 = arith.constant dense<0xFF800000> : vector<8xf32>
    %14 = vector.multi_reduction <maximumf>, %13, %cst_10 [1] : vector<8x128xf32> to vector<8xf32>
    %15 = vector.shape_cast %14 : vector<8xf32> to vector<8x1xf32>
    %16 = vector.broadcast %15 : vector<8x1xf32> to vector<8x128xf32>
    %17 = arith.subf %13, %16 : vector<8x128xf32>
    %18 = math.exp %17 : vector<8x128xf32>
    %cst_11 = arith.constant dense<0.000000e+00> : vector<8xf32>
    %19 = vector.multi_reduction <add>, %18, %cst_11 [1] : vector<8x128xf32> to vector<8xf32>
    %20 = vector.shape_cast %19 : vector<8xf32> to vector<8x1xf32>
    %21 = math.log %20 : vector<8x1xf32>
    %22 = vector.broadcast %21 : vector<8x1xf32> to vector<8x128xf32>
    %23 = arith.subf %17, %22 : vector<8x128xf32>
    %c0_12 = arith.constant 0 : index
    %c0_13 = arith.constant 0 : index
    %24 = vector.load %arg6[%c0_12, %c0_13] : memref<8x128xf32, #tpu.memory_space<vmem>>, vector<8x128xf32>
    tpu.vector_store %arg6[%c0_12, %c0_13], %23 {strides = array<i32>} : memref<8x128xf32, #tpu.memory_space<vmem>>, vector<8x128xf32>,
    return
  }
  func.func @transform_0(%arg0: i32) -> (i32, i32) {
    %c0_i32 = arith.constant 0 : i32
    %c0_i32_0 = arith.constant 0 : i32
    return %arg0, %c0_i32 : i32, i32
  }
  func.func @transform_1(%arg0: i32) -> (i32, i32) {
    %c0_i32 = arith.constant 0 : i32
    %c0_i32_0 = arith.constant 0 : i32
    %c0_i32_1 = arith.constant 0 : i32
    return %c0_i32, %c0_i32_0 : i32, i32
  }
  func.func @transform_2(%arg0: i32) -> (i32, i32) {
    %c0_i32 = arith.constant 0 : i32
    %c0_i32_0 = arith.constant 0 : i32
    %c0_i32_1 = arith.constant 0 : i32
    return %c0_i32, %c0_i32_0 : i32, i32
  }
  func.func @transform_3(%arg0: i32) -> (i32, i32) {
    %c0_i32 = arith.constant 0 : i32
    %c0_i32_0 = arith.constant 0 : i32
    %c0_i32_1 = arith.constant 0 : i32
    return %c0_i32, %c0_i32_0 : i32, i32
  }
  func.func @transform_4(%arg0: i32) -> (i32, i32) {
    %c0_i32 = arith.constant 0 : i32
    %c0_i32_0 = arith.constant 0 : i32
    %c0_i32_1 = arith.constant 0 : i32
    return %c0_i32, %c0_i32_0 : i32, i32
  }
  func.func @transform_5(%arg0: i32) -> (i32, i32) {
    %c0_i32 = arith.constant 0 : i32
    %c0_i32_0 = arith.constant 0 : i32
    return %arg0, %c0_i32 : i32, i32
  }
}

</mosaic_0001>

<llo_original>
// kernel: tpu_custom_call.1
$region0: #{tpu_custom_call.1}
  #allocation0 [shape = 'u32[]', space=smem, size = 0x4, offset = 0x4, fixed_abs, tag = 'smem constant byte address 0x4 - core index']
  #allocation1 [shape = 'u32[144,128]{1,0:T(1,128)}', space=vmem, size = 0x12000, scoped, tag = 'internal scratch']
  %s0 = inlined_call_operand.vmem [shape: f32[8,784], index: 0, kind: input, shape index: {}]
  %s1 = inlined_call_operand.vmem [shape: bf16[784,390], index: 1, kind: input, shape index: {}]
  %s2 = inlined_call_operand.vmem [shape: f32[1,390], index: 2, kind: input, shape index: {}]
  %s3 = inlined_call_operand.vmem [shape: bf16[390,128], index: 3, kind: input, shape index: {}]
  %s4 = inlined_call_operand.vmem [shape: f32[1,128], index: 4, kind: input, shape index: {}]
  %s5 = inlined_call_operand.hbm [shape: f32[8,128], index: 5, kind: output, shape index: {}]
  %s6 = sld [smem:[#allocation0]]
  $region30: #{tpu_custom_call.1} parent=0
    _
  %s8 = ssub.s32 1, %s6
  %s9 = scalar_select 0, %s8, %s6
  $region1: #{tpu_custom_call.1} parent=0
    #allocation2 [shape = 'u8[4096]{0}', space=vmem, size = 0x1000, scoped, tag = 'output window, operand 0, single buffered']
    #allocation3 [shape = 's32[1]{0}', space=sflag, size = 0x4, scoped, tag = 'scoped memory for tpu_custom_call.1']
    %10 = vsyncpa [#allocation3], 0
    // Predicated region
    $region2: #{tpu_custom_call.1} parent=1 // pred_check
      _
    $region3: #{tpu_custom_call.1} parent=1 // pred_check_branch
      %12 = sbr.rel (0) target = $region5
    $region4: #{tpu_custom_call.1} parent=1 // pred_region
      _
    $region5: #{tpu_custom_call.1} parent=1 // pred_fallthru
      _
    // Predicated region
    $region6: #{tpu_custom_call.1} parent=1 // pred_check
      _
    $region7: #{tpu_custom_call.1} parent=1 // pred_check_branch
      %14 = sbr.rel (0) target = $region9
    $region8: #{tpu_custom_call.1} parent=1 // pred_region
      _
    $region9: #{tpu_custom_call.1} parent=1 // pred_fallthru
      _
    // Predicated region
    $region10: #{tpu_custom_call.1} parent=1 // pred_check
      _
    $region11: #{tpu_custom_call.1} parent=1 // pred_check_branch
      %16 = sbr.rel (0) target = $region13
    $region12: #{tpu_custom_call.1} parent=1 // pred_region
      _
    $region13: #{tpu_custom_call.1} parent=1 // pred_fallthru
      _
    // Predicated region
    $region14: #{tpu_custom_call.1} parent=1 // pred_check
      _
    $region15: #{tpu_custom_call.1} parent=1 // pred_check_branch
      %18 = sbr.rel (0) target = $region17
    $region16: #{tpu_custom_call.1} parent=1 // pred_region
      _
    $region17: #{tpu_custom_call.1} parent=1 // pred_fallthru
      _
    // Predicated region
    $region18: #{tpu_custom_call.1} parent=1 // pred_check
      _
    $region19: #{tpu_custom_call.1} parent=1 // pred_check_branch
      %20 = sbr.rel (0) target = $region21
    $region20: #{tpu_custom_call.1} parent=1 // pred_region
      _
    $region21: #{tpu_custom_call.1} parent=1 // pred_fallthru
      _
    %v22 = vld [vmem:[%s0] sm:$0xff]
    %v23 = vld [vmem:[%s0 + $0x8] sm:$0xff]
    %v24 = vld [vmem:[%s0 + $0x10] sm:$0xff]
    %v25 = vld [vmem:[%s0 + $0x18] sm:$0xff]
    %v26 = vld [vmem:[%s0 + $0x20] sm:$0xff]
    %v27 = vld [vmem:[%s0 + $0x28] sm:$0xff]
    %v28 = vld [vmem:[%s0 + $0x30] sm:$0xff]
    %v29 = vpack.c.bf16 %v22, %v22
    %v30 = vpack.c.bf16 %v23, %v23
    %v31 = vpack.c.bf16 %v24, %v24
    %v32 = vpack.c.bf16 %v25, %v25
    %v33 = vpack.c.bf16 %v26, %v26
    %v34 = vpack.c.bf16 %v27, %v27
    %v35 = vpack.c.bf16 %v28, %v28
    %v36 = vld [vmem:[%s1] sm:$0xff]
    %v37 = vld [vmem:[%s1 + $0x8] sm:$0xff]
    %v38 = vld [vmem:[%s1 + $0x10] sm:$0xff]
    %v39 = vld [vmem:[%s1 + $0x18] sm:$0xff]
    %v40 = vld [vmem:[%s1 + $0x20] sm:$0xff]
    %v41 = vld [vmem:[%s1 + $0x28] sm:$0xff]
    %v42 = vld [vmem:[%s1 + $0x30] sm:$0xff]
    %v43 = vld [vmem:[%s1 + $0x38] sm:$0xff]
    %v44 = vld [vmem:[%s1 + $0x40] sm:$0xff]
    %v45 = vld [vmem:[%s1 + $0x48] sm:$0xff]
    %v46 = vld [vmem:[%s1 + $0x50] sm:$0xff]
    %v47 = vld [vmem:[%s1 + $0x58] sm:$0xff]
    %v48 = vld [vmem:[%s1 + $0x60] sm:$0xff]
    %v49 = vld [vmem:[%s1 + $0x68] sm:$0xff]
    %v50 = vld [vmem:[%s1 + $0x70] sm:$0xff]
    %v51 = vld [vmem:[%s1 + $0x78] sm:$0xff]
    %v52 = vld [vmem:[%s1 + $0x80] sm:$0xff]
    %v53 = vld [vmem:[%s1 + $0x88] sm:$0xff]
    %v54 = vld [vmem:[%s1 + $0x90] sm:$0xff]
    %v55 = vld [vmem:[%s1 + $0x98] sm:$0xff]
    %v56 = vld [vmem:[%s1 + $0xa0] sm:$0xff]
    %v57 = vld [vmem:[%s1 + $0xa8] sm:$0xff]
    %v58 = vld [vmem:[%s1 + $0xb0] sm:$0xff]
    %v59 = vld [vmem:[%s1 + $0xb8] sm:$0xff]
    %v60 = vld [vmem:[%s1 + $0xc0] sm:$0xff]
    %v61 = vld [vmem:[%s1 + $0xc8] sm:$0xff]
    %v62 = vld [vmem:[%s1 + $0xd0] sm:$0xff]
    %v63 = vld [vmem:[%s1 + $0xd8] sm:$0xff]
    %v64 = vld [vmem:[%s1 + $0xe0] sm:$0xff]
    %v65 = vld [vmem:[%s1 + $0xe8] sm:$0xff]
    %v66 = vld [vmem:[%s1 + $0xf0] sm:$0xff]
    %v67 = vld [vmem:[%s1 + $0xf8] sm:$0xff]
    %v68 = vld [vmem:[%s1 + $0x100] sm:$0xff]
    %v69 = vld [vmem:[%s1 + $0x108] sm:$0xff]
    %v70 = vld [vmem:[%s1 + $0x110] sm:$0xff]
    %v71 = vld [vmem:[%s1 + $0x118] sm:$0xff]
    %v72 = vld [vmem:[%s1 + $0x120] sm:$0xff]
    %v73 = vld [vmem:[%s1 + $0x128] sm:$0xff]
    %v74 = vld [vmem:[%s1 + $0x130] sm:$0xff]
    %v75 = vld [vmem:[%s1 + $0x138] sm:$0xff]
    %v76 = vld [vmem:[%s1 + $0x140] sm:$0xff]
    %v77 = vld [vmem:[%s1 + $0x148] sm:$0xff]
    %v78 = vld [vmem:[%s1 + $0x150] sm:$0xff]
    %v79 = vld [vmem:[%s1 + $0x158] sm:$0xff]
    %v80 = vld [vmem:[%s1 + $0x160] sm:$0xff]
    %v81 = vld [vmem:[%s1 + $0x168] sm:$0xff]
    %v82 = vld [vmem:[%s1 + $0x170] sm:$0xff]
    %v83 = vld [vmem:[%s1 + $0x178] sm:$0xff]
    %v84 = vld [vmem:[%s1 + $0x180] sm:$0xff]
    %v85 = vld [vmem:[%s1 + $0x188] sm:$0xff]
    %v86 = vld [vmem:[%s1 + $0x190] sm:$0xff]
    %v87 = vld [vmem:[%s1 + $0x198] sm:$0xff]
    %v88 = vld [vmem:[%s1 + $0x1a0] sm:$0xff]
    %v89 = vld [vmem:[%s1 + $0x1a8] sm:$0xff]
    %v90 = vld [vmem:[%s1 + $0x1b0] sm:$0xff]
    %v91 = vld [vmem:[%s1 + $0x1b8] sm:$0xff]
    %v92 = vld [vmem:[%s1 + $0x1c0] sm:$0xff]
    %v93 = vld [vmem:[%s1 + $0x1c8] sm:$0xff]
    %v94 = vld [vmem:[%s1 + $0x1d0] sm:$0xff]
    %v95 = vld [vmem:[%s1 + $0x1d8] sm:$0xff]
    %v96 = vld [vmem:[%s1 + $0x1e0] sm:$0xff]
    %v97 = vld [vmem:[%s1 + $0x1e8] sm:$0xff]
    %v98 = vld [vmem:[%s1 + $0x1f0] sm:$0xff]
    %v99 = vld [vmem:[%s1 + $0x1f8] sm:$0xff]
    %v100 = vld [vmem:[%s1 + $0x200] sm:$0xff]
    %v101 = vld [vmem:[%s1 + $0x208] sm:$0xff]
    %v102 = vld [vmem:[%s1 + $0x210] sm:$0xff]
    %v103 = vld [vmem:[%s1 + $0x218] sm:$0xff]
    %v104 = vld [vmem:[%s1 + $0x220] sm:$0xff]
    %v105 = vld [vmem:[%s1 + $0x228] sm:$0xff]
    %v106 = vld [vmem:[%s1 + $0x230] sm:$0xff]
    %v107 = vld [vmem:[%s1 + $0x238] sm:$0xff]
    %v108 = vld [vmem:[%s1 + $0x240] sm:$0xff]
    %v109 = vld [vmem:[%s1 + $0x248] sm:$0xff]
    %v110 = vld [vmem:[%s1 + $0x250] sm:$0xff]
    %v111 = vld [vmem:[%s1 + $0x258] sm:$0xff]
    %v112 = vld [vmem:[%s1 + $0x260] sm:$0xff]
    %v113 = vld [vmem:[%s1 + $0x268] sm:$0xff]
    %v114 = vld [vmem:[%s1 + $0x270] sm:$0xff]
    %v115 = vld [vmem:[%s1 + $0x278] sm:$0xff]
    %v116 = vld [vmem:[%s1 + $0x280] sm:$0xff]
    %v117 = vld [vmem:[%s1 + $0x288] sm:$0xff]
    %v118 = vld [vmem:[%s1 + $0x290] sm:$0xff]
    %v119 = vld [vmem:[%s1 + $0x298] sm:$0xff]
    %v120 = vld [vmem:[%s1 + $0x2a0] sm:$0xff]
    %v121 = vld [vmem:[%s1 + $0x2a8] sm:$0xff]
    %v122 = vld [vmem:[%s1 + $0x2b0] sm:$0xff]
    %v123 = vld [vmem:[%s1 + $0x2b8] sm:$0xff]
    %v124 = vld [vmem:[%s1 + $0x2c0] sm:$0xff]
    %v125 = vld [vmem:[%s1 + $0x2c8] sm:$0xff]
    %v126 = vld [vmem:[%s1 + $0x2d0] sm:$0xff]
    %v127 = vld [vmem:[%s1 + $0x2d8] sm:$0xff]
    %v128 = vld [vmem:[%s1 + $0x2e0] sm:$0xff]
    %v129 = vld [vmem:[%s1 + $0x2e8] sm:$0xff]
    %v130 = vld [vmem:[%s1 + $0x2f0] sm:$0xff]
    %v131 = vld [vmem:[%s1 + $0x2f8] sm:$0xff]
    %v132 = vld [vmem:[%s1 + $0x300] sm:$0xff]
    %v133 = vld [vmem:[%s1 + $0x308] sm:$0xff]
    %v134 = vld [vmem:[%s1 + $0x310] sm:$0xff]
    %v135 = vld [vmem:[%s1 + $0x318] sm:$0xff]
    %v136 = vld [vmem:[%s1 + $0x320] sm:$0xff]
    %v137 = vld [vmem:[%s1 + $0x328] sm:$0xff]
    %v138 = vld [vmem:[%s1 + $0x330] sm:$0xff]
    %v139 = vld [vmem:[%s1 + $0x338] sm:$0xff]
    %v140 = vld [vmem:[%s1 + $0x340] sm:$0xff]
    %v141 = vld [vmem:[%s1 + $0x348] sm:$0xff]
    %v142 = vld [vmem:[%s1 + $0x350] sm:$0xff]
    %v143 = vld [vmem:[%s1 + $0x358] sm:$0xff]
    %v144 = vld [vmem:[%s1 + $0x360] sm:$0xff]
    %v145 = vld [vmem:[%s1 + $0x368] sm:$0xff]
    %v146 = vld [vmem:[%s1 + $0x370] sm:$0xff]
    %v147 = vld [vmem:[%s1 + $0x378] sm:$0xff]
    %v148 = vld [vmem:[%s1 + $0x380] sm:$0xff]
    %v149 = vld [vmem:[%s1 + $0x388] sm:$0xff]
    %v150 = vld [vmem:[%s1 + $0x390] sm:$0xff]
    %v151 = vld [vmem:[%s1 + $0x398] sm:$0xff]
    %v152 = vld [vmem:[%s1 + $0x3a0] sm:$0xff]
    %v153 = vld [vmem:[%s1 + $0x3a8] sm:$0xff]
    %v154 = vld [vmem:[%s1 + $0x3b0] sm:$0xff]
    %v155 = vld [vmem:[%s1 + $0x3b8] sm:$0xff]
    %v156 = vld [vmem:[%s1 + $0x3c0] sm:$0xff]
    %v157 = vld [vmem:[%s1 + $0x3c8] sm:$0xff]
    %v158 = vld [vmem:[%s1 + $0x3d0] sm:$0xff]
    %v159 = vld [vmem:[%s1 + $0x3d8] sm:$0xff]
    %v160 = vld [vmem:[%s1 + $0x3e0] sm:$0xff]
    %v161 = vld [vmem:[%s1 + $0x3e8] sm:$0xff]
    %v162 = vld [vmem:[%s1 + $0x3f0] sm:$0xff]
    %v163 = vld [vmem:[%s1 + $0x3f8] sm:$0xff]
    %v164 = vld [vmem:[%s1 + $0x400] sm:$0xff]
    %v165 = vld [vmem:[%s1 + $0x408] sm:$0xff]
    %v166 = vld [vmem:[%s1 + $0x410] sm:$0xff]
    %v167 = vld [vmem:[%s1 + $0x418] sm:$0xff]
    %v168 = vld [vmem:[%s1 + $0x420] sm:$0xff]
    %v169 = vld [vmem:[%s1 + $0x428] sm:$0xff]
    %v170 = vld [vmem:[%s1 + $0x430] sm:$0xff]
    %v171 = vld [vmem:[%s1 + $0x438] sm:$0xff]
    %v172 = vld [vmem:[%s1 + $0x440] sm:$0xff]
    %v173 = vld [vmem:[%s1 + $0x448] sm:$0xff]
    %v174 = vld [vmem:[%s1 + $0x450] sm:$0xff]
    %v175 = vld [vmem:[%s1 + $0x458] sm:$0xff]
    %v176 = vld [vmem:[%s1 + $0x460] sm:$0xff]
    %v177 = vld [vmem:[%s1 + $0x468] sm:$0xff]
    %v178 = vld [vmem:[%s1 + $0x470] sm:$0xff]
    %v179 = vld [vmem:[%s1 + $0x478] sm:$0xff]
    %v180 = vld [vmem:[%s1 + $0x480] sm:$0xff]
    %v181 = vld [vmem:[%s1 + $0x488] sm:$0xff]
    %v182 = vld [vmem:[%s1 + $0x490] sm:$0xff]
    %v183 = vld [vmem:[%s1 + $0x498] sm:$0xff]
    %v184 = vld [vmem:[%s1 + $0x4a0] sm:$0xff]
    %v185 = vld [vmem:[%s1 + $0x4a8] sm:$0xff]
    %v186 = vld [vmem:[%s1 + $0x4b0] sm:$0xff]
    %v187 = vld [vmem:[%s1 + $0x4b8] sm:$0xff]
    %v188 = vld [vmem:[%s1 + $0x4c0] sm:$0xff]
    %v189 = vld [vmem:[%s1 + $0x4c8] sm:$0xff]
    %v190 = vld [vmem:[%s1 + $0x4d0] sm:$0xff]
    %v191 = vld [vmem:[%s1 + $0x4d8] sm:$0xff]
    %v192 = vld [vmem:[%s1 + $0x4e0] sm:$0xff]
    %v193 = vld [vmem:[%s1 + $0x4e8] sm:$0xff]
    %v194 = vld [vmem:[%s1 + $0x4f0] sm:$0xff]
    %v195 = vld [vmem:[%s1 + $0x4f8] sm:$0xff]
    %v196 = vld [vmem:[%s1 + $0x500] sm:$0xff]
    %v197 = vld [vmem:[%s1 + $0x508] sm:$0xff]
    %v198 = vld [vmem:[%s1 + $0x510] sm:$0xff]
    %v199 = vld [vmem:[%s1 + $0x518] sm:$0xff]
    %v200 = vld [vmem:[%s1 + $0x520] sm:$0xff]
    %v201 = vld [vmem:[%s1 + $0x528] sm:$0xff]
    %v202 = vld [vmem:[%s1 + $0x530] sm:$0xff]
    %v203 = vld [vmem:[%s1 + $0x538] sm:$0xff]
    %v204 = vld [vmem:[%s1 + $0x540] sm:$0xff]
    %v205 = vld [vmem:[%s1 + $0x548] sm:$0xff]
    %v206 = vld [vmem:[%s1 + $0x550] sm:$0xff]
    %v207 = vld [vmem:[%s1 + $0x558] sm:$0xff]
    %v208 = vld [vmem:[%s1 + $0x560] sm:$0xff]
    %v209 = vld [vmem:[%s1 + $0x568] sm:$0xff]
    %v210 = vld [vmem:[%s1 + $0x570] sm:$0xff]
    %v211 = vld [vmem:[%s1 + $0x578] sm:$0xff]
    %v212 = vld [vmem:[%s1 + $0x580] sm:$0xff]
    %v213 = vld [vmem:[%s1 + $0x588] sm:$0xff]
    %v214 = vld [vmem:[%s1 + $0x590] sm:$0xff]
    %v215 = vld [vmem:[%s1 + $0x598] sm:$0xff]
    %v216 = vld [vmem:[%s1 + $0x5a0] sm:$0xff]
    %v217 = vld [vmem:[%s1 + $0x5a8] sm:$0xff]
    %v218 = vld [vmem:[%s1 + $0x5b0] sm:$0xff]
    %v219 = vld [vmem:[%s1 + $0x5b8] sm:$0xff]
    %v220 = vld [vmem:[%s1 + $0x5c0] sm:$0xff]
    %v221 = vld [vmem:[%s1 + $0x5c8] sm:$0xff]
    %v222 = vld [vmem:[%s1 + $0x5d0] sm:$0xff]
    %v223 = vld [vmem:[%s1 + $0x5d8] sm:$0xff]
    %v224 = vld [vmem:[%s1 + $0x5e0] sm:$0xff]
    %v225 = vld [vmem:[%s1 + $0x5e8] sm:$0xff]
    %v226 = vld [vmem:[%s1 + $0x5f0] sm:$0xff]
    %v227 = vld [vmem:[%s1 + $0x5f8] sm:$0xff]
    %v228 = vld [vmem:[%s1 + $0x600] sm:$0xff]
    %v229 = vld [vmem:[%s1 + $0x608] sm:$0xff]
    %v230 = vld [vmem:[%s1 + $0x610] sm:$0xff]
    %v231 = vld [vmem:[%s1 + $0x618] sm:$0xff]
    %v232 = vld [vmem:[%s2] sm:$0xf]
    %v234 = vlaneseq
    %v235 = vshrl.u32 %v234, 7
    %v236 = vsub.s32 0, %v235
    %v237 = vrot.slane %v232, %v236
    %v238 = vlaneseq
    %v239 = vshrl.u32 %v238, 7
    %v240 = vsub.s32 1, %v239
    %v241 = vrot.slane %v232, %v240
    %v242 = vlaneseq
    %v243 = vshrl.u32 %v242, 7
    %v244 = vsub.s32 2, %v243
    %v245 = vrot.slane %v232, %v244
    %v246 = vlaneseq
    %v247 = vshrl.u32 %v246, 7
    %v248 = vsub.s32 3, %v247
    %v249 = vrot.slane %v232, %v248
    %v450 = vunpack.c.l.b16 %v36
    %v451 = vunpack.c.h.b16 %v36
    %v452 = vunpack.c.l.b16 %v37
    %v453 = vunpack.c.h.b16 %v37
    %v454 = vunpack.c.l.b16 %v38
    %v455 = vunpack.c.h.b16 %v38
    %v456 = vunpack.c.l.b16 %v39
    %v457 = vunpack.c.h.b16 %v39
    %v458 = vunpack.c.l.b16 %v40
    %v459 = vunpack.c.h.b16 %v40
    %v460 = vunpack.c.l.b16 %v41
    %v461 = vunpack.c.h.b16 %v41
    %v462 = vunpack.c.l.b16 %v42
    %v463 = vunpack.c.h.b16 %v42
    %v464 = vunpack.c.l.b16 %v43
    %v465 = vunpack.c.h.b16 %v43
    %v466 = vunpack.c.l.b16 %v44
    %v467 = vunpack.c.h.b16 %v44
    %v468 = vunpack.c.l.b16 %v45
    %v469 = vunpack.c.h.b16 %v45
    %v470 = vunpack.c.l.b16 %v46
    %v471 = vunpack.c.h.b16 %v46
    %v472 = vunpack.c.l.b16 %v47
    %v473 = vunpack.c.h.b16 %v47
    %v474 = vunpack.c.l.b16 %v48
    %v475 = vunpack.c.h.b16 %v48
    %v476 = vunpack.c.l.b16 %v49
    %v477 = vunpack.c.h.b16 %v49
    %v478 = vunpack.c.l.b16 %v50
    %v479 = vunpack.c.h.b16 %v50
    %v480 = vunpack.c.l.b16 %v51
    %v481 = vunpack.c.h.b16 %v51
    %v482 = vunpack.c.l.b16 %v52
    %v483 = vunpack.c.h.b16 %v52
    %v484 = vunpack.c.l.b16 %v53
    %v485 = vunpack.c.h.b16 %v53
    %v486 = vunpack.c.l.b16 %v54
    %v487 = vunpack.c.h.b16 %v54
    %v488 = vunpack.c.l.b16 %v55
    %v489 = vunpack.c.h.b16 %v55
    %v490 = vunpack.c.l.b16 %v56
    %v491 = vunpack.c.h.b16 %v56
    %v492 = vunpack.c.l.b16 %v57
    %v493 = vunpack.c.h.b16 %v57
    %v494 = vunpack.c.l.b16 %v58
    %v495 = vunpack.c.h.b16 %v58
    %v496 = vunpack.c.l.b16 %v59
    %v497 = vunpack.c.h.b16 %v59
    %v498 = vunpack.c.l.b16 %v60
    %v499 = vunpack.c.h.b16 %v60
    %v500 = vunpack.c.l.b16 %v61
    %v501 = vunpack.c.h.b16 %v61
    %v502 = vunpack.c.l.b16 %v62
    %v503 = vunpack.c.h.b16 %v62
    %v504 = vunpack.c.l.b16 %v63
    %v505 = vunpack.c.h.b16 %v63
    %v506 = vunpack.c.l.b16 %v64
    %v507 = vunpack.c.h.b16 %v64
    %v508 = vunpack.c.l.b16 %v65
    %v509 = vunpack.c.h.b16 %v65
    %v510 = vunpack.c.l.b16 %v66
    %v511 = vunpack.c.h.b16 %v66
    %v512 = vunpack.c.l.b16 %v67
    %v513 = vunpack.c.h.b16 %v67
    %v514 = vunpack.c.l.b16 %v68
    %v515 = vunpack.c.h.b16 %v68
    %v516 = vunpack.c.l.b16 %v69
    %v517 = vunpack.c.h.b16 %v69
    %v518 = vunpack.c.l.b16 %v70
    %v519 = vunpack.c.h.b16 %v70
    %v520 = vunpack.c.l.b16 %v71
    %v521 = vunpack.c.h.b16 %v71
    %v522 = vunpack.c.l.b16 %v72
    %v523 = vunpack.c.h.b16 %v72
    %v524 = vunpack.c.l.b16 %v73
    %v525 = vunpack.c.h.b16 %v73
    %v526 = vunpack.c.l.b16 %v74
    %v527 = vunpack.c.h.b16 %v74
    %v528 = vunpack.c.l.b16 %v75
    %v529 = vunpack.c.h.b16 %v75
    %v530 = vunpack.c.l.b16 %v76
    %v531 = vunpack.c.h.b16 %v76
    %v532 = vunpack.c.l.b16 %v77
    %v533 = vunpack.c.h.b16 %v77
    %v534 = vunpack.c.l.b16 %v78
    %v535 = vunpack.c.h.b16 %v78
    %v536 = vunpack.c.l.b16 %v79
    %v537 = vunpack.c.h.b16 %v79
    %v538 = vunpack.c.l.b16 %v80
    %v539 = vunpack.c.h.b16 %v80
    %v540 = vunpack.c.l.b16 %v81
    %v541 = vunpack.c.h.b16 %v81
    %v542 = vunpack.c.l.b16 %v82
    %v543 = vunpack.c.h.b16 %v82
    %v544 = vunpack.c.l.b16 %v83
    %v545 = vunpack.c.h.b16 %v83
    %v546 = vunpack.c.l.b16 %v84
    %v547 = vunpack.c.h.b16 %v84
    %v548 = vunpack.c.l.b16 %v85
    %v549 = vunpack.c.h.b16 %v85
    %v550 = vunpack.c.l.b16 %v86
    %v551 = vunpack.c.h.b16 %v86
    %v552 = vunpack.c.l.b16 %v87
    %v553 = vunpack.c.h.b16 %v87
    %v554 = vunpack.c.l.b16 %v88
    %v555 = vunpack.c.h.b16 %v88
    %v556 = vunpack.c.l.b16 %v89
    %v557 = vunpack.c.h.b16 %v89
    %v558 = vunpack.c.l.b16 %v90
    %v559 = vunpack.c.h.b16 %v90
    %v560 = vunpack.c.l.b16 %v91
    %v561 = vunpack.c.h.b16 %v91
    %v562 = vunpack.c.l.b16 %v92
    %v563 = vunpack.c.h.b16 %v92
    %v564 = vunpack.c.l.b16 %v93
    %v565 = vunpack.c.h.b16 %v93
    %v566 = vunpack.c.l.b16 %v94
    %v567 = vunpack.c.h.b16 %v94
    %v568 = vunpack.c.l.b16 %v95
    %v569 = vunpack.c.h.b16 %v95
    %v570 = vunpack.c.l.b16 %v96
    %v571 = vunpack.c.h.b16 %v96
    %v572 = vunpack.c.l.b16 %v97
    %v573 = vunpack.c.h.b16 %v97
    %v574 = vunpack.c.l.b16 %v98
    %v575 = vunpack.c.h.b16 %v98
    %v576 = vunpack.c.l.b16 %v99
    %v577 = vunpack.c.h.b16 %v99
    %v578 = vunpack.c.l.b16 %v100
    %v579 = vunpack.c.h.b16 %v100
    %v580 = vunpack.c.l.b16 %v101
    %v581 = vunpack.c.h.b16 %v101
    %v582 = vunpack.c.l.b16 %v102
    %v583 = vunpack.c.h.b16 %v102
    %v584 = vunpack.c.l.b16 %v103
    %v585 = vunpack.c.h.b16 %v103
    %v586 = vunpack.c.l.b16 %v104
    %v587 = vunpack.c.h.b16 %v104
    %v588 = vunpack.c.l.b16 %v105
    %v589 = vunpack.c.h.b16 %v105
    %v590 = vunpack.c.l.b16 %v106
    %v591 = vunpack.c.h.b16 %v106
    %v592 = vunpack.c.l.b16 %v107
    %v593 = vunpack.c.h.b16 %v107
    %v594 = vunpack.c.l.b16 %v108
    %v595 = vunpack.c.h.b16 %v108
    %v596 = vunpack.c.l.b16 %v109
    %v597 = vunpack.c.h.b16 %v109
    %v598 = vunpack.c.l.b16 %v110
    %v599 = vunpack.c.h.b16 %v110
    %v600 = vunpack.c.l.b16 %v111
    %v601 = vunpack.c.h.b16 %v111
    %v602 = vunpack.c.l.b16 %v112
    %v603 = vunpack.c.h.b16 %v112
    %v604 = vunpack.c.l.b16 %v113
    %v605 = vunpack.c.h.b16 %v113
    %v606 = vunpack.c.l.b16 %v114
    %v607 = vunpack.c.h.b16 %v114
    %v608 = vunpack.c.l.b16 %v115
    %v609 = vunpack.c.h.b16 %v115
    %v610 = vunpack.c.l.b16 %v116
    %v611 = vunpack.c.h.b16 %v116
    %v612 = vunpack.c.l.b16 %v117
    %v613 = vunpack.c.h.b16 %v117
    %v614 = vunpack.c.l.b16 %v118
    %v615 = vunpack.c.h.b16 %v118
    %v616 = vunpack.c.l.b16 %v119
    %v617 = vunpack.c.h.b16 %v119
    %v618 = vunpack.c.l.b16 %v120
    %v619 = vunpack.c.h.b16 %v120
    %v620 = vunpack.c.l.b16 %v121
    %v621 = vunpack.c.h.b16 %v121
    %v622 = vunpack.c.l.b16 %v122
    %v623 = vunpack.c.h.b16 %v122
    %v624 = vunpack.c.l.b16 %v123
    %v625 = vunpack.c.h.b16 %v123
    %v626 = vunpack.c.l.b16 %v124
    %v627 = vunpack.c.h.b16 %v124
    %v628 = vunpack.c.l.b16 %v125
    %v629 = vunpack.c.h.b16 %v125
    %v630 = vunpack.c.l.b16 %v126
    %v631 = vunpack.c.h.b16 %v126
    %v632 = vunpack.c.l.b16 %v127
    %v633 = vunpack.c.h.b16 %v127
    %v634 = vunpack.c.l.b16 %v128
    %v635 = vunpack.c.h.b16 %v128
    %v636 = vunpack.c.l.b16 %v129
    %v637 = vunpack.c.h.b16 %v129
    %v638 = vunpack.c.l.b16 %v130
    %v639 = vunpack.c.h.b16 %v130
    %v640 = vunpack.c.l.b16 %v131
    %v641 = vunpack.c.h.b16 %v131
    %v642 = vunpack.c.l.b16 %v132
    %v643 = vunpack.c.h.b16 %v132
    %v644 = vunpack.c.l.b16 %v133
    %v645 = vunpack.c.h.b16 %v133
    %v646 = vunpack.c.l.b16 %v134
    %v647 = vunpack.c.h.b16 %v134
    %v648 = vunpack.c.l.b16 %v135
    %v649 = vunpack.c.h.b16 %v135
    %v650 = vunpack.c.l.b16 %v136
    %v651 = vunpack.c.h.b16 %v136
    %v652 = vunpack.c.l.b16 %v137
    %v653 = vunpack.c.h.b16 %v137
    %v654 = vunpack.c.l.b16 %v138
    %v655 = vunpack.c.h.b16 %v138
    %v656 = vunpack.c.l.b16 %v139
    %v657 = vunpack.c.h.b16 %v139
    %v658 = vunpack.c.l.b16 %v140
    %v659 = vunpack.c.h.b16 %v140
    %v660 = vunpack.c.l.b16 %v141
    %v661 = vunpack.c.h.b16 %v141
    %v662 = vunpack.c.l.b16 %v142
    %v663 = vunpack.c.h.b16 %v142
    %v664 = vunpack.c.l.b16 %v143
    %v665 = vunpack.c.h.b16 %v143
    %v666 = vunpack.c.l.b16 %v144
    %v667 = vunpack.c.h.b16 %v144
    %v668 = vunpack.c.l.b16 %v145
    %v669 = vunpack.c.h.b16 %v145
    %v670 = vunpack.c.l.b16 %v146
    %v671 = vunpack.c.h.b16 %v146
    %v672 = vunpack.c.l.b16 %v147
    %v673 = vunpack.c.h.b16 %v147
    %v674 = vunpack.c.l.b16 %v148
    %v675 = vunpack.c.h.b16 %v148
    %v676 = vunpack.c.l.b16 %v149
    %v677 = vunpack.c.h.b16 %v149
    %v678 = vunpack.c.l.b16 %v150
    %v679 = vunpack.c.h.b16 %v150
    %v680 = vunpack.c.l.b16 %v151
    %v681 = vunpack.c.h.b16 %v151
    %v682 = vunpack.c.l.b16 %v152
    %v683 = vunpack.c.h.b16 %v152
    %v684 = vunpack.c.l.b16 %v153
    %v685 = vunpack.c.h.b16 %v153
    %v686 = vunpack.c.l.b16 %v154
    %v687 = vunpack.c.h.b16 %v154
    %v688 = vunpack.c.l.b16 %v155
    %v689 = vunpack.c.h.b16 %v155
    %v690 = vunpack.c.l.b16 %v156
    %v691 = vunpack.c.h.b16 %v156
    %v692 = vunpack.c.l.b16 %v157
    %v693 = vunpack.c.h.b16 %v157
    %v694 = vunpack.c.l.b16 %v158
    %v695 = vunpack.c.h.b16 %v158
    %v696 = vunpack.c.l.b16 %v159
    %v697 = vunpack.c.h.b16 %v159
    %v698 = vunpack.c.l.b16 %v160
    %v699 = vunpack.c.h.b16 %v160
    %v700 = vunpack.c.l.b16 %v161
    %v701 = vunpack.c.h.b16 %v161
    %v702 = vunpack.c.l.b16 %v162
    %v703 = vunpack.c.h.b16 %v162
    %v704 = vunpack.c.l.b16 %v163
    %v705 = vunpack.c.h.b16 %v163
    %v706 = vunpack.c.l.b16 %v164
    %v707 = vunpack.c.h.b16 %v164
    %v708 = vunpack.c.l.b16 %v165
    %v709 = vunpack.c.h.b16 %v165
    %v710 = vunpack.c.l.b16 %v166
    %v711 = vunpack.c.h.b16 %v166
    %v712 = vunpack.c.l.b16 %v167
    %v713 = vunpack.c.h.b16 %v167
    %v714 = vunpack.c.l.b16 %v168
    %v715 = vunpack.c.h.b16 %v168
    %v716 = vunpack.c.l.b16 %v169
    %v717 = vunpack.c.h.b16 %v169
    %v718 = vunpack.c.l.b16 %v170
    %v719 = vunpack.c.h.b16 %v170
    %v720 = vunpack.c.l.b16 %v171
    %v721 = vunpack.c.h.b16 %v171
    %v722 = vunpack.c.l.b16 %v172
    %v723 = vunpack.c.h.b16 %v172
    %v724 = vunpack.c.l.b16 %v173
    %v725 = vunpack.c.h.b16 %v173
    %v726 = vunpack.c.l.b16 %v174
    %v727 = vunpack.c.h.b16 %v174
    %v728 = vunpack.c.l.b16 %v175
    %v729 = vunpack.c.h.b16 %v175
    %v730 = vunpack.c.l.b16 %v176
    %v731 = vunpack.c.h.b16 %v176
    %v732 = vunpack.c.l.b16 %v177
    %v733 = vunpack.c.h.b16 %v177
    %v734 = vunpack.c.l.b16 %v178
    %v735 = vunpack.c.h.b16 %v178
    %v736 = vunpack.c.l.b16 %v179
    %v737 = vunpack.c.h.b16 %v179
    %v738 = vunpack.c.l.b16 %v180
    %v739 = vunpack.c.h.b16 %v180
    %v740 = vunpack.c.l.b16 %v181
    %v741 = vunpack.c.h.b16 %v181
    %v742 = vunpack.c.l.b16 %v182
    %v743 = vunpack.c.h.b16 %v182
    %v744 = vunpack.c.l.b16 %v183
    %v745 = vunpack.c.h.b16 %v183
    %v746 = vunpack.c.l.b16 %v184
    %v747 = vunpack.c.h.b16 %v184
    %v748 = vunpack.c.l.b16 %v185
    %v749 = vunpack.c.h.b16 %v185
    %v750 = vunpack.c.l.b16 %v186
    %v751 = vunpack.c.h.b16 %v186
    %v752 = vunpack.c.l.b16 %v187
    %v753 = vunpack.c.h.b16 %v187
    %v754 = vunpack.c.l.b16 %v188
    %v755 = vunpack.c.h.b16 %v188
    %v756 = vunpack.c.l.b16 %v189
    %v757 = vunpack.c.h.b16 %v189
    %v758 = vunpack.c.l.b16 %v190
    %v759 = vunpack.c.h.b16 %v190
    %v760 = vunpack.c.l.b16 %v191
    %v761 = vunpack.c.h.b16 %v191
    %v762 = vunpack.c.l.b16 %v192
    %v763 = vunpack.c.h.b16 %v192
    %v764 = vunpack.c.l.b16 %v193
    %v765 = vunpack.c.h.b16 %v193
    %v766 = vunpack.c.l.b16 %v194
    %v767 = vunpack.c.h.b16 %v194
    %v768 = vunpack.c.l.b16 %v195
    %v769 = vunpack.c.h.b16 %v195
    %v770 = vunpack.c.l.b16 %v196
    %v771 = vunpack.c.h.b16 %v196
    %v772 = vunpack.c.l.b16 %v197
    %v773 = vunpack.c.h.b16 %v197
    %v774 = vunpack.c.l.b16 %v198
    %v775 = vunpack.c.h.b16 %v198
    %v776 = vunpack.c.l.b16 %v199
    %v777 = vunpack.c.h.b16 %v199
    %v778 = vunpack.c.l.b16 %v200
    %v779 = vunpack.c.h.b16 %v200
    %v780 = vunpack.c.l.b16 %v201
    %v781 = vunpack.c.h.b16 %v201
    %v782 = vunpack.c.l.b16 %v202
    %v783 = vunpack.c.h.b16 %v202
    %v784 = vunpack.c.l.b16 %v203
    %v785 = vunpack.c.h.b16 %v203
    %v786 = vunpack.c.l.b16 %v204
    %v787 = vunpack.c.h.b16 %v204
    %v788 = vunpack.c.l.b16 %v205
    %v789 = vunpack.c.h.b16 %v205
    %v790 = vunpack.c.l.b16 %v206
    %v791 = vunpack.c.h.b16 %v206
    %v792 = vunpack.c.l.b16 %v207
    %v793 = vunpack.c.h.b16 %v207
    %v794 = vunpack.c.l.b16 %v208
    %v795 = vunpack.c.h.b16 %v208
    %v796 = vunpack.c.l.b16 %v209
    %v797 = vunpack.c.h.b16 %v209
    %v798 = vunpack.c.l.b16 %v210
    %v799 = vunpack.c.h.b16 %v210
    %v800 = vunpack.c.l.b16 %v211
    %v801 = vunpack.c.h.b16 %v211
    %v802 = vunpack.c.l.b16 %v212
    %v803 = vunpack.c.h.b16 %v212
    %v804 = vunpack.c.l.b16 %v213
    %v805 = vunpack.c.h.b16 %v213
    %v806 = vunpack.c.l.b16 %v214
    %v807 = vunpack.c.h.b16 %v214
    %v808 = vunpack.c.l.b16 %v215
    %v809 = vunpack.c.h.b16 %v215
    %v810 = vunpack.c.l.b16 %v216
    %v811 = vunpack.c.h.b16 %v216
    %v812 = vunpack.c.l.b16 %v217
    %v813 = vunpack.c.h.b16 %v217
    %v814 = vunpack.c.l.b16 %v218
    %v815 = vunpack.c.h.b16 %v218
    %v816 = vunpack.c.l.b16 %v219
    %v817 = vunpack.c.h.b16 %v219
    %v818 = vunpack.c.l.b16 %v220
    %v819 = vunpack.c.h.b16 %v220
    %v820 = vunpack.c.l.b16 %v221
    %v821 = vunpack.c.h.b16 %v221
    %v822 = vunpack.c.l.b16 %v222
    %v823 = vunpack.c.h.b16 %v222
    %v824 = vunpack.c.l.b16 %v223
    %v825 = vunpack.c.h.b16 %v223
    %v826 = vunpack.c.l.b16 %v224
    %v827 = vunpack.c.h.b16 %v224
    %v828 = vunpack.c.l.b16 %v225
    %v829 = vunpack.c.h.b16 %v225
    %v830 = vunpack.c.l.b16 %v226
    %v831 = vunpack.c.h.b16 %v226
    %v832 = vunpack.c.l.b16 %v227
    %v833 = vunpack.c.h.b16 %v227
    %v834 = vunpack.c.l.b16 %v228
    %v835 = vunpack.c.h.b16 %v228
    %v836 = vunpack.c.l.b16 %v229
    %v837 = vunpack.c.h.b16 %v229
    %v838 = vunpack.c.l.b16 %v230
    %v839 = vunpack.c.h.b16 %v230
    %v840 = vunpack.c.l.b16 %v231
    %v841 = vunpack.c.h.b16 %v231
    %v842 = vpack.c.b16 %v454, %v450
    %v843 = vpack.c.b16 %v455, %v451
    %v844 = vpack.c.b16 %v456, %v452
    %v845 = vpack.c.b16 %v457, %v453
    %v846 = vpack.c.b16 %v462, %v458
    %v847 = vpack.c.b16 %v463, %v459
    %v848 = vpack.c.b16 %v464, %v460
    %v849 = vpack.c.b16 %v465, %v461
    %v850 = vpack.c.b16 %v470, %v466
    %v851 = vpack.c.b16 %v471, %v467
    %v852 = vpack.c.b16 %v472, %v468
    %v853 = vpack.c.b16 %v473, %v469
    %v854 = vpack.c.b16 %v478, %v474
    %v855 = vpack.c.b16 %v479, %v475
    %v856 = vpack.c.b16 %v480, %v476
    %v857 = vpack.c.b16 %v481, %v477
    %v858 = vpack.c.b16 %v486, %v482
    %v859 = vpack.c.b16 %v487, %v483
    %v860 = vpack.c.b16 %v488, %v484
    %v861 = vpack.c.b16 %v489, %v485
    %v862 = vpack.c.b16 %v494, %v490
    %v863 = vpack.c.b16 %v495, %v491
    %v864 = vpack.c.b16 %v496, %v492
    %v865 = vpack.c.b16 %v497, %v493
    %v866 = vpack.c.b16 %v502, %v498
    %v867 = vpack.c.b16 %v503, %v499
    %v868 = vpack.c.b16 %v504, %v500
    %v869 = vpack.c.b16 %v505, %v501
    %v870 = vpack.c.b16 %v510, %v506
    %v871 = vpack.c.b16 %v511, %v507
    %v872 = vpack.c.b16 %v512, %v508
    %v873 = vpack.c.b16 %v513, %v509
    %v874 = vpack.c.b16 %v518, %v514
    %v875 = vpack.c.b16 %v519, %v515
    %v876 = vpack.c.b16 %v520, %v516
    %v877 = vpack.c.b16 %v521, %v517
    %v878 = vpack.c.b16 %v526, %v522
    %v879 = vpack.c.b16 %v527, %v523
    %v880 = vpack.c.b16 %v528, %v524
    %v881 = vpack.c.b16 %v529, %v525
    %v882 = vpack.c.b16 %v534, %v530
    %v883 = vpack.c.b16 %v535, %v531
    %v884 = vpack.c.b16 %v536, %v532
    %v885 = vpack.c.b16 %v537, %v533
    %v886 = vpack.c.b16 %v542, %v538
    %v887 = vpack.c.b16 %v543, %v539
    %v888 = vpack.c.b16 %v544, %v540
    %v889 = vpack.c.b16 %v545, %v541
    %v890 = vpack.c.b16 %v550, %v546
    %v891 = vpack.c.b16 %v551, %v547
    %v892 = vpack.c.b16 %v552, %v548
    %v893 = vpack.c.b16 %v553, %v549
    %v894 = vpack.c.b16 %v558, %v554
    %v895 = vpack.c.b16 %v559, %v555
    %v896 = vpack.c.b16 %v560, %v556
    %v897 = vpack.c.b16 %v561, %v557
    %v898 = vpack.c.b16 %v566, %v562
    %v899 = vpack.c.b16 %v567, %v563
    %v900 = vpack.c.b16 %v568, %v564
    %v901 = vpack.c.b16 %v569, %v565
    %v902 = vpack.c.b16 %v574, %v570
    %v903 = vpack.c.b16 %v575, %v571
    %v904 = vpack.c.b16 %v576, %v572
    %v905 = vpack.c.b16 %v577, %v573
    %v906 = vpack.c.b16 %v582, %v578
    %v907 = vpack.c.b16 %v583, %v579
    %v908 = vpack.c.b16 %v584, %v580
    %v909 = vpack.c.b16 %v585, %v581
    %v910 = vpack.c.b16 %v590, %v586
    %v911 = vpack.c.b16 %v591, %v587
    %v912 = vpack.c.b16 %v592, %v588
    %v913 = vpack.c.b16 %v593, %v589
    %v914 = vpack.c.b16 %v598, %v594
    %v915 = vpack.c.b16 %v599, %v595
    %v916 = vpack.c.b16 %v600, %v596
    %v917 = vpack.c.b16 %v601, %v597
    %v918 = vpack.c.b16 %v606, %v602
    %v919 = vpack.c.b16 %v607, %v603
    %v920 = vpack.c.b16 %v608, %v604
    %v921 = vpack.c.b16 %v609, %v605
    %v922 = vpack.c.b16 %v614, %v610
    %v923 = vpack.c.b16 %v615, %v611
    %v924 = vpack.c.b16 %v616, %v612
    %v925 = vpack.c.b16 %v617, %v613
    %v926 = vpack.c.b16 %v622, %v618
    %v927 = vpack.c.b16 %v623, %v619
    %v928 = vpack.c.b16 %v624, %v620
    %v929 = vpack.c.b16 %v625, %v621
    %v930 = vpack.c.b16 %v630, %v626
    %v931 = vpack.c.b16 %v631, %v627
    %v932 = vpack.c.b16 %v632, %v628
    %v933 = vpack.c.b16 %v633, %v629
    %v934 = vpack.c.b16 %v638, %v634
    %v935 = vpack.c.b16 %v639, %v635
    %v936 = vpack.c.b16 %v640, %v636
    %v937 = vpack.c.b16 %v641, %v637
    %v938 = vpack.c.b16 %v646, %v642
    %v939 = vpack.c.b16 %v647, %v643
    %v940 = vpack.c.b16 %v648, %v644
    %v941 = vpack.c.b16 %v649, %v645
    %v942 = vpack.c.b16 %v654, %v650
    %v943 = vpack.c.b16 %v655, %v651
    %v944 = vpack.c.b16 %v656, %v652
    %v945 = vpack.c.b16 %v657, %v653
    %v946 = vpack.c.b16 %v662, %v658
    %v947 = vpack.c.b16 %v663, %v659
    %v948 = vpack.c.b16 %v664, %v660
    %v949 = vpack.c.b16 %v665, %v661
    %v950 = vpack.c.b16 %v670, %v666
    %v951 = vpack.c.b16 %v671, %v667
    %v952 = vpack.c.b16 %v672, %v668
    %v953 = vpack.c.b16 %v673, %v669
    %v954 = vpack.c.b16 %v678, %v674
    %v955 = vpack.c.b16 %v679, %v675
    %v956 = vpack.c.b16 %v680, %v676
    %v957 = vpack.c.b16 %v681, %v677
    %v958 = vpack.c.b16 %v686, %v682
    %v959 = vpack.c.b16 %v687, %v683
    %v960 = vpack.c.b16 %v688, %v684
    %v961 = vpack.c.b16 %v689, %v685
    %v962 = vpack.c.b16 %v694, %v690
    %v963 = vpack.c.b16 %v695, %v691
    %v964 = vpack.c.b16 %v696, %v692
    %v965 = vpack.c.b16 %v697, %v693
    %v966 = vpack.c.b16 %v702, %v698
    %v967 = vpack.c.b16 %v703, %v699
    %v968 = vpack.c.b16 %v704, %v700
    %v969 = vpack.c.b16 %v705, %v701
    %v970 = vpack.c.b16 %v710, %v706
    %v971 = vpack.c.b16 %v711, %v707
    %v972 = vpack.c.b16 %v712, %v708
    %v973 = vpack.c.b16 %v713, %v709
    %v974 = vpack.c.b16 %v718, %v714
    %v975 = vpack.c.b16 %v719, %v715
    %v976 = vpack.c.b16 %v720, %v716
    %v977 = vpack.c.b16 %v721, %v717
    %v978 = vpack.c.b16 %v726, %v722
    %v979 = vpack.c.b16 %v727, %v723
    %v980 = vpack.c.b16 %v728, %v724
    %v981 = vpack.c.b16 %v729, %v725
    %v982 = vpack.c.b16 %v734, %v730
    %v983 = vpack.c.b16 %v735, %v731
    %v984 = vpack.c.b16 %v736, %v732
    %v985 = vpack.c.b16 %v737, %v733
    %v986 = vpack.c.b16 %v742, %v738
    %v987 = vpack.c.b16 %v743, %v739
    %v988 = vpack.c.b16 %v744, %v740
    %v989 = vpack.c.b16 %v745, %v741
    %v990 = vpack.c.b16 %v750, %v746
    %v991 = vpack.c.b16 %v751, %v747
    %v992 = vpack.c.b16 %v752, %v748
    %v993 = vpack.c.b16 %v753, %v749
    %v994 = vpack.c.b16 %v758, %v754
    %v995 = vpack.c.b16 %v759, %v755
    %v996 = vpack.c.b16 %v760, %v756
    %v997 = vpack.c.b16 %v761, %v757
    %v998 = vpack.c.b16 %v766, %v762
    %v999 = vpack.c.b16 %v767, %v763
    %v1000 = vpack.c.b16 %v768, %v764
    %v1001 = vpack.c.b16 %v769, %v765
    %v1002 = vpack.c.b16 %v774, %v770
    %v1003 = vpack.c.b16 %v775, %v771
    %v1004 = vpack.c.b16 %v776, %v772
    %v1005 = vpack.c.b16 %v777, %v773
    %v1006 = vpack.c.b16 %v782, %v778
    %v1007 = vpack.c.b16 %v783, %v779
    %v1008 = vpack.c.b16 %v784, %v780
    %v1009 = vpack.c.b16 %v785, %v781
    %v1010 = vpack.c.b16 %v790, %v786
    %v1011 = vpack.c.b16 %v791, %v787
    %v1012 = vpack.c.b16 %v792, %v788
    %v1013 = vpack.c.b16 %v793, %v789
    %v1014 = vpack.c.b16 %v798, %v794
    %v1015 = vpack.c.b16 %v799, %v795
    %v1016 = vpack.c.b16 %v800, %v796
    %v1017 = vpack.c.b16 %v801, %v797
    %v1018 = vpack.c.b16 %v806, %v802
    %v1019 = vpack.c.b16 %v807, %v803
    %v1020 = vpack.c.b16 %v808, %v804
    %v1021 = vpack.c.b16 %v809, %v805
    %v1022 = vpack.c.b16 %v814, %v810
    %v1023 = vpack.c.b16 %v815, %v811
    %v1024 = vpack.c.b16 %v816, %v812
    %v1025 = vpack.c.b16 %v817, %v813
    %v1026 = vpack.c.b16 %v822, %v818
    %v1027 = vpack.c.b16 %v823, %v819
    %v1028 = vpack.c.b16 %v824, %v820
    %v1029 = vpack.c.b16 %v825, %v821
    %v1030 = vpack.c.b16 %v830, %v826
    %v1031 = vpack.c.b16 %v831, %v827
    %v1032 = vpack.c.b16 %v832, %v828
    %v1033 = vpack.c.b16 %v833, %v829
    %v1034 = vpack.c.b16 %v838, %v834
    %v1035 = vpack.c.b16 %v839, %v835
    %v1036 = vpack.c.b16 %v840, %v836
    %v1037 = vpack.c.b16 %v841, %v837
    %vm1234 = vcmask 130048
    %v1236 = vsel %vm1234, %v35, 0
    %1238 = vmatprep.subr.bf16.mxu0 %v871
    %1239 = vmatpush1.bf16.msra.mxu0 %v870
    %1240 = vmatprep.subr.bf16.mxu0 %v867
    %1241 = vmatpush1.bf16.msra.mxu0 %v866
    %1242 = vmatprep.subr.bf16.mxu0 %v863
    %1243 = vmatpush1.bf16.msra.mxu0 %v862
    %1244 = vmatprep.subr.bf16.mxu0 %v859
    %1245 = vmatpush1.bf16.msra.mxu0 %v858
    %1246 = vmatprep.subr.bf16.mxu0 %v855
    %1247 = vmatpush1.bf16.msra.mxu0 %v854
    %1248 = vmatprep.subr.bf16.mxu0 %v851
    %1249 = vmatpush1.bf16.msra.mxu0 %v850
    %1250 = vmatprep.subr.bf16.mxu0 %v847
    %1251 = vmatpush1.bf16.msra.mxu0 %v846
    %1252 = vmatprep.subr.bf16.mxu0 %v843
    %1253 = vmatpush1.bf16.msra.mxu0 %v842
    %1254 = vmatprep.subr.bf16.mxu0 %v903
    %1255 = vmatpush2.bf16.msra.mxu0 %v902
    %1256 = vmatprep.subr.bf16.mxu0 %v899
    %1257 = vmatpush2.bf16.msra.mxu0 %v898
    %1258 = vmatprep.subr.bf16.mxu0 %v895
    %1259 = vmatpush2.bf16.msra.mxu0 %v894
    %1260 = vmatprep.subr.bf16.mxu0 %v891
    %1261 = vmatpush2.bf16.msra.mxu0 %v890
    %1262 = vmatprep.subr.bf16.mxu0 %v887
    %1263 = vmatpush2.bf16.msra.mxu0 %v886
    %1264 = vmatprep.subr.bf16.mxu0 %v883
    %1265 = vmatpush2.bf16.msra.mxu0 %v882
    %1266 = vmatprep.subr.bf16.mxu0 %v879
    %1267 = vmatpush2.bf16.msra.mxu0 %v878
    %1268 = vmatprep.subr.bf16.mxu0 %v875
    %1269 = vmatpush2.bf16.msra.mxu0 %v874
    %1270 = vmatprep.mubr.bf16.mxu0 %v30
    %1271 = vmatmul.mubr.bf16.gmra.mxu0 %v29
    %v1272 = vpop.f32.mrf.mxu0
    %v1273 = vadd.f32 %v237, %v1272
    %v1274 = vpop.f32.mrf.mxu0
    %v1275 = vadd.f32 %v241, %v1274
    %v1276 = vpop.f32.mrf.mxu0
    %v1277 = vpop.f32.mrf.mxu0
    %1278 = vdwg.mxu0
    %1279 = vmatprep.subr.bf16.mxu0 %v935
    %1280 = vmatpush1.bf16.msra.mxu0 %v934
    %1281 = vmatprep.subr.bf16.mxu0 %v931
    %1282 = vmatpush1.bf16.msra.mxu0 %v930
    %1283 = vmatprep.subr.bf16.mxu0 %v927
    %1284 = vmatpush1.bf16.msra.mxu0 %v926
    %1285 = vmatprep.subr.bf16.mxu0 %v923
    %1286 = vmatpush1.bf16.msra.mxu0 %v922
    %1287 = vmatprep.subr.bf16.mxu0 %v919
    %1288 = vmatpush1.bf16.msra.mxu0 %v918
    %1289 = vmatprep.subr.bf16.mxu0 %v915
    %1290 = vmatpush1.bf16.msra.mxu0 %v914
    %1291 = vmatprep.subr.bf16.mxu0 %v911
    %1292 = vmatpush1.bf16.msra.mxu0 %v910
    %1293 = vmatprep.subr.bf16.mxu0 %v907
    %1294 = vmatpush1.bf16.msra.mxu0 %v906
    %1295 = vmatprep.subr.bf16.mxu0 %v967
    %1296 = vmatpush2.bf16.msra.mxu0 %v966
    %1297 = vmatprep.subr.bf16.mxu0 %v963
    %1298 = vmatpush2.bf16.msra.mxu0 %v962
    %1299 = vmatprep.subr.bf16.mxu0 %v959
    %1300 = vmatpush2.bf16.msra.mxu0 %v958
    %1301 = vmatprep.subr.bf16.mxu0 %v955
    %1302 = vmatpush2.bf16.msra.mxu0 %v954
    %1303 = vmatprep.subr.bf16.mxu0 %v951
    %1304 = vmatpush2.bf16.msra.mxu0 %v950
    %1305 = vmatprep.subr.bf16.mxu0 %v947
    %1306 = vmatpush2.bf16.msra.mxu0 %v946
    %1307 = vmatprep.subr.bf16.mxu0 %v943
    %1308 = vmatpush2.bf16.msra.mxu0 %v942
    %1309 = vmatprep.subr.bf16.mxu0 %v939
    %1310 = vmatpush2.bf16.msra.mxu0 %v938
    %1311 = vmatprep.mubr.bf16.mxu0 %v32
    %1312 = vmatmul.mubr.bf16.gmra.mxu0 %v31
    %v1313 = vpop.f32.mrf.mxu0
    %v1314 = vadd.f32 %v1273, %v1313
    %v1315 = vpop.f32.mrf.mxu0
    %v1316 = vadd.f32 %v1275, %v1315
    %v1317 = vpop.f32.mrf.mxu0
    %v1318 = vpop.f32.mrf.mxu0
    %1319 = vdwg.mxu0
    %1320 = vmatprep.subr.bf16.mxu0 %v999
    %1321 = vmatpush1.bf16.msra.mxu0 %v998
    %1322 = vmatprep.subr.bf16.mxu0 %v995
    %1323 = vmatpush1.bf16.msra.mxu0 %v994
    %1324 = vmatprep.subr.bf16.mxu0 %v991
    %1325 = vmatpush1.bf16.msra.mxu0 %v990
    %1326 = vmatprep.subr.bf16.mxu0 %v987
    %1327 = vmatpush1.bf16.msra.mxu0 %v986
    %1328 = vmatprep.subr.bf16.mxu0 %v983
    %1329 = vmatpush1.bf16.msra.mxu0 %v982
    %1330 = vmatprep.subr.bf16.mxu0 %v979
    %1331 = vmatpush1.bf16.msra.mxu0 %v978
    %1332 = vmatprep.subr.bf16.mxu0 %v975
    %1333 = vmatpush1.bf16.msra.mxu0 %v974
    %1334 = vmatprep.subr.bf16.mxu0 %v971
    %1335 = vmatpush1.bf16.msra.mxu0 %v970
    %1336 = vmatprep.subr.bf16.mxu0 %v1031
    %1337 = vmatpush2.bf16.msra.mxu0 %v1030
    %1338 = vmatprep.subr.bf16.mxu0 %v1027
    %1339 = vmatpush2.bf16.msra.mxu0 %v1026
    %1340 = vmatprep.subr.bf16.mxu0 %v1023
    %1341 = vmatpush2.bf16.msra.mxu0 %v1022
    %1342 = vmatprep.subr.bf16.mxu0 %v1019
    %1343 = vmatpush2.bf16.msra.mxu0 %v1018
    %1344 = vmatprep.subr.bf16.mxu0 %v1015
    %1345 = vmatpush2.bf16.msra.mxu0 %v1014
    %1346 = vmatprep.subr.bf16.mxu0 %v1011
    %1347 = vmatpush2.bf16.msra.mxu0 %v1010
    %1348 = vmatprep.subr.bf16.mxu0 %v1007
    %1349 = vmatpush2.bf16.msra.mxu0 %v1006
    %1350 = vmatprep.subr.bf16.mxu0 %v1003
    %1351 = vmatpush2.bf16.msra.mxu0 %v1002
    %1352 = vmatprep.mubr.bf16.mxu0 %v34
    %1353 = vmatmul.mubr.bf16.gmra.mxu0 %v33
    %v1354 = vpop.f32.mrf.mxu0
    %v1355 = vadd.f32 %v1314, %v1354
    %v1356 = vpop.f32.mrf.mxu0
    %v1357 = vadd.f32 %v1316, %v1356
    %v1358 = vpop.f32.mrf.mxu0
    %v1359 = vpop.f32.mrf.mxu0
    %1360 = vdwg.mxu0
    %1361 = vmatprep.subr.bf16.mxu0 0
    %1362 = vmatpush1.bf16.msra.mxu0 0
    %1363 = vmatprep.subr.bf16.mxu0 0
    %1364 = vmatpush1.bf16.msra.mxu0 0
    %1365 = vmatprep.subr.bf16.mxu0 0
    %1366 = vmatpush1.bf16.msra.mxu0 0
    %1367 = vmatprep.subr.bf16.mxu0 0
    %1368 = vmatpush1.bf16.msra.mxu0 0
    %1369 = vmatprep.subr.bf16.mxu0 0
    %1370 = vmatpush1.bf16.msra.mxu0 0
    %1371 = vmatprep.subr.bf16.mxu0 0
    %1372 = vmatpush1.bf16.msra.mxu0 0
    %1373 = vmatprep.subr.bf16.mxu0 0
    %1374 = vmatpush1.bf16.msra.mxu0 0
    %1375 = vmatprep.subr.bf16.mxu0 %v1035
    %1376 = vmatpush1.bf16.msra.mxu0 %v1034
    %1377 = vmatprep.subr.bf16.mxu0 0
    %1378 = vmatpush2.bf16.msra.mxu0 0
    %1379 = vmatprep.subr.bf16.mxu0 0
    %1380 = vmatpush2.bf16.msra.mxu0 0
    %1381 = vmatprep.subr.bf16.mxu0 0
    %1382 = vmatpush2.bf16.msra.mxu0 0
    %1383 = vmatprep.subr.bf16.mxu0 0
    %1384 = vmatpush2.bf16.msra.mxu0 0
    %1385 = vmatprep.subr.bf16.mxu0 0
    %1386 = vmatpush2.bf16.msra.mxu0 0
    %1387 = vmatprep.subr.bf16.mxu0 0
    %1388 = vmatpush2.bf16.msra.mxu0 0
    %1389 = vmatprep.subr.bf16.mxu0 0
    %1390 = vmatpush2.bf16.msra.mxu0 0
    %1391 = vmatprep.subr.bf16.mxu0 0
    %1392 = vmatpush2.bf16.msra.mxu0 0
    %1393 = vmatprep.mubr.bf16.mxu0 0
    %1394 = vmatmul.mubr.bf16.gmra.mxu0 %v1236
    %v1395 = vpop.f32.mrf.mxu0
    %v1396 = vadd.f32 %v1355, %v1395
    %v1397 = vpop.f32.mrf.mxu0
    %v1398 = vadd.f32 %v1357, %v1397
    %v1399 = vpop.f32.mrf.mxu0
    %v1400 = vpop.f32.mrf.mxu0
    %1401 = vdwg.mxu0
    %1402 = vmatprep.subr.bf16.mxu0 %v873
    %1403 = vmatpush1.bf16.msra.mxu0 %v872
    %1404 = vmatprep.subr.bf16.mxu0 %v869
    %1405 = vmatpush1.bf16.msra.mxu0 %v868
    %1406 = vmatprep.subr.bf16.mxu0 %v865
    %1407 = vmatpush1.bf16.msra.mxu0 %v864
    %1408 = vmatprep.subr.bf16.mxu0 %v861
    %1409 = vmatpush1.bf16.msra.mxu0 %v860
    %1410 = vmatprep.subr.bf16.mxu0 %v857
    %1411 = vmatpush1.bf16.msra.mxu0 %v856
    %1412 = vmatprep.subr.bf16.mxu0 %v853
    %1413 = vmatpush1.bf16.msra.mxu0 %v852
    %1414 = vmatprep.subr.bf16.mxu0 %v849
    %1415 = vmatpush1.bf16.msra.mxu0 %v848
    %1416 = vmatprep.subr.bf16.mxu0 %v845
    %1417 = vmatpush1.bf16.msra.mxu0 %v844
    %1418 = vmatprep.subr.bf16.mxu0 %v905
    %1419 = vmatpush2.bf16.msra.mxu0 %v904
    %1420 = vmatprep.subr.bf16.mxu0 %v901
    %1421 = vmatpush2.bf16.msra.mxu0 %v900
    %1422 = vmatprep.subr.bf16.mxu0 %v897
    %1423 = vmatpush2.bf16.msra.mxu0 %v896
    %1424 = vmatprep.subr.bf16.mxu0 %v893
    %1425 = vmatpush2.bf16.msra.mxu0 %v892
    %1426 = vmatprep.subr.bf16.mxu0 %v889
    %1427 = vmatpush2.bf16.msra.mxu0 %v888
    %1428 = vmatprep.subr.bf16.mxu0 %v885
    %1429 = vmatpush2.bf16.msra.mxu0 %v884
    %1430 = vmatprep.subr.bf16.mxu0 %v881
    %1431 = vmatpush2.bf16.msra.mxu0 %v880
    %1432 = vmatprep.subr.bf16.mxu0 %v877
    %1433 = vmatpush2.bf16.msra.mxu0 %v876
    %1434 = vmatprep.mubr.bf16.mxu0 %v30
    %1435 = vmatmul.mubr.bf16.gmra.mxu0 %v29
    %v1436 = vpop.f32.mrf.mxu0
    %v1437 = vadd.f32 %v245, %v1436
    %v1438 = vpop.f32.mrf.mxu0
    %v1439 = vadd.f32 %v249, %v1438
    %v1440 = vpop.f32.mrf.mxu0
    %v1441 = vpop.f32.mrf.mxu0
    %1442 = vdwg.mxu0
    %1443 = vmatprep.subr.bf16.mxu0 %v937
    %1444 = vmatpush1.bf16.msra.mxu0 %v936
    %1445 = vmatprep.subr.bf16.mxu0 %v933
    %1446 = vmatpush1.bf16.msra.mxu0 %v932
    %1447 = vmatprep.subr.bf16.mxu0 %v929
    %1448 = vmatpush1.bf16.msra.mxu0 %v928
    %1449 = vmatprep.subr.bf16.mxu0 %v925
    %1450 = vmatpush1.bf16.msra.mxu0 %v924
    %1451 = vmatprep.subr.bf16.mxu0 %v921
    %1452 = vmatpush1.bf16.msra.mxu0 %v920
    %1453 = vmatprep.subr.bf16.mxu0 %v917
    %1454 = vmatpush1.bf16.msra.mxu0 %v916
    %1455 = vmatprep.subr.bf16.mxu0 %v913
    %1456 = vmatpush1.bf16.msra.mxu0 %v912
    %1457 = vmatprep.subr.bf16.mxu0 %v909
    %1458 = vmatpush1.bf16.msra.mxu0 %v908
    %1459 = vmatprep.subr.bf16.mxu0 %v969
    %1460 = vmatpush2.bf16.msra.mxu0 %v968
    %1461 = vmatprep.subr.bf16.mxu0 %v965
    %1462 = vmatpush2.bf16.msra.mxu0 %v964
    %1463 = vmatprep.subr.bf16.mxu0 %v961
    %1464 = vmatpush2.bf16.msra.mxu0 %v960
    %1465 = vmatprep.subr.bf16.mxu0 %v957
    %1466 = vmatpush2.bf16.msra.mxu0 %v956
    %1467 = vmatprep.subr.bf16.mxu0 %v953
    %1468 = vmatpush2.bf16.msra.mxu0 %v952
    %1469 = vmatprep.subr.bf16.mxu0 %v949
    %1470 = vmatpush2.bf16.msra.mxu0 %v948
    %1471 = vmatprep.subr.bf16.mxu0 %v945
    %1472 = vmatpush2.bf16.msra.mxu0 %v944
    %1473 = vmatprep.subr.bf16.mxu0 %v941
    %1474 = vmatpush2.bf16.msra.mxu0 %v940
    %1475 = vmatprep.mubr.bf16.mxu0 %v32
    %1476 = vmatmul.mubr.bf16.gmra.mxu0 %v31
    %v1477 = vpop.f32.mrf.mxu0
    %v1478 = vadd.f32 %v1437, %v1477
    %v1479 = vpop.f32.mrf.mxu0
    %v1480 = vadd.f32 %v1439, %v1479
    %v1481 = vpop.f32.mrf.mxu0
    %v1482 = vpop.f32.mrf.mxu0
    %1483 = vdwg.mxu0
    %1484 = vmatprep.subr.bf16.mxu0 %v1001
    %1485 = vmatpush1.bf16.msra.mxu0 %v1000
    %1486 = vmatprep.subr.bf16.mxu0 %v997
    %1487 = vmatpush1.bf16.msra.mxu0 %v996
    %1488 = vmatprep.subr.bf16.mxu0 %v993
    %1489 = vmatpush1.bf16.msra.mxu0 %v992
    %1490 = vmatprep.subr.bf16.mxu0 %v989
    %1491 = vmatpush1.bf16.msra.mxu0 %v988
    %1492 = vmatprep.subr.bf16.mxu0 %v985
    %1493 = vmatpush1.bf16.msra.mxu0 %v984
    %1494 = vmatprep.subr.bf16.mxu0 %v981
    %1495 = vmatpush1.bf16.msra.mxu0 %v980
    %1496 = vmatprep.subr.bf16.mxu0 %v977
    %1497 = vmatpush1.bf16.msra.mxu0 %v976
    %1498 = vmatprep.subr.bf16.mxu0 %v973
    %1499 = vmatpush1.bf16.msra.mxu0 %v972
    %1500 = vmatprep.subr.bf16.mxu0 %v1033
    %1501 = vmatpush2.bf16.msra.mxu0 %v1032
    %1502 = vmatprep.subr.bf16.mxu0 %v1029
    %1503 = vmatpush2.bf16.msra.mxu0 %v1028
    %1504 = vmatprep.subr.bf16.mxu0 %v1025
    %1505 = vmatpush2.bf16.msra.mxu0 %v1024
    %1506 = vmatprep.subr.bf16.mxu0 %v1021
    %1507 = vmatpush2.bf16.msra.mxu0 %v1020
    %1508 = vmatprep.subr.bf16.mxu0 %v1017
    %1509 = vmatpush2.bf16.msra.mxu0 %v1016
    %1510 = vmatprep.subr.bf16.mxu0 %v1013
    %1511 = vmatpush2.bf16.msra.mxu0 %v1012
    %1512 = vmatprep.subr.bf16.mxu0 %v1009
    %1513 = vmatpush2.bf16.msra.mxu0 %v1008
    %1514 = vmatprep.subr.bf16.mxu0 %v1005
    %1515 = vmatpush2.bf16.msra.mxu0 %v1004
    %1516 = vmatprep.mubr.bf16.mxu0 %v34
    %1517 = vmatmul.mubr.bf16.gmra.mxu0 %v33
    %v1518 = vpop.f32.mrf.mxu0
    %v1519 = vadd.f32 %v1478, %v1518
    %v1520 = vpop.f32.mrf.mxu0
    %v1521 = vadd.f32 %v1480, %v1520
    %v1522 = vpop.f32.mrf.mxu0
    %v1523 = vpop.f32.mrf.mxu0
    %1524 = vdwg.mxu0
    %1525 = vmatprep.subr.bf16.mxu0 0
    %1526 = vmatpush1.bf16.msra.mxu0 0
    %1527 = vmatprep.subr.bf16.mxu0 0
    %1528 = vmatpush1.bf16.msra.mxu0 0
    %1529 = vmatprep.subr.bf16.mxu0 0
    %1530 = vmatpush1.bf16.msra.mxu0 0
    %1531 = vmatprep.subr.bf16.mxu0 0
    %1532 = vmatpush1.bf16.msra.mxu0 0
    %1533 = vmatprep.subr.bf16.mxu0 0
    %1534 = vmatpush1.bf16.msra.mxu0 0
    %1535 = vmatprep.subr.bf16.mxu0 0
    %1536 = vmatpush1.bf16.msra.mxu0 0
    %1537 = vmatprep.subr.bf16.mxu0 0
    %1538 = vmatpush1.bf16.msra.mxu0 0
    %1539 = vmatprep.subr.bf16.mxu0 %v1037
    %1540 = vmatpush1.bf16.msra.mxu0 %v1036
    %1541 = vmatprep.subr.bf16.mxu0 0
    %1542 = vmatpush2.bf16.msra.mxu0 0
    %1543 = vmatprep.subr.bf16.mxu0 0
    %1544 = vmatpush2.bf16.msra.mxu0 0
    %1545 = vmatprep.subr.bf16.mxu0 0
    %1546 = vmatpush2.bf16.msra.mxu0 0
    %1547 = vmatprep.subr.bf16.mxu0 0
    %1548 = vmatpush2.bf16.msra.mxu0 0
    %1549 = vmatprep.subr.bf16.mxu0 0
    %1550 = vmatpush2.bf16.msra.mxu0 0
    %1551 = vmatprep.subr.bf16.mxu0 0
    %1552 = vmatpush2.bf16.msra.mxu0 0
    %1553 = vmatprep.subr.bf16.mxu0 0
    %1554 = vmatpush2.bf16.msra.mxu0 0
    %1555 = vmatprep.subr.bf16.mxu0 0
    %1556 = vmatpush2.bf16.msra.mxu0 0
    %1557 = vmatprep.mubr.bf16.mxu0 0
    %1558 = vmatmul.mubr.bf16.gmra.mxu0 %v1236
    %v1559 = vpop.f32.mrf.mxu0
    %v1560 = vadd.f32 %v1519, %v1559
    %v1561 = vpop.f32.mrf.mxu0
    %v1562 = vadd.f32 %v1521, %v1561
    %v1563 = vpop.f32.mrf.mxu0
    %v1564 = vpop.f32.mrf.mxu0
    %1565 = vdwg.mxu0
    %v1566 = vtanh.pop %v1396
    %v1567 = vtanh.pop %v1398
    %v1568 = vtanh.pop %v1560
    %v1569 = vtanh.pop %v1562
    %v1570 = vpack.c.bf16 %v1566, %v1566
    %v1571 = vpack.c.bf16 %v1567, %v1567
    %v1572 = vpack.c.bf16 %v1568, %v1568
    %v1573 = vpack.c.bf16 %v1569, %v1569
    %v1574 = vld [vmem:[%s3] sm:$0xf]
    %v1575 = vld [vmem:[%s3 + $0x4] sm:$0xf]
    %v1576 = vld [vmem:[%s3 + $0x8] sm:$0xf]
    %v1577 = vld [vmem:[%s3 + $0xc] sm:$0xf]
    %v1578 = vld [vmem:[%s3 + $0x10] sm:$0xf]
    %v1579 = vld [vmem:[%s3 + $0x14] sm:$0xf]
    %v1580 = vld [vmem:[%s3 + $0x18] sm:$0xf]
    %v1581 = vld [vmem:[%s3 + $0x1c] sm:$0xf]
    %v1582 = vld [vmem:[%s3 + $0x20] sm:$0xf]
    %v1583 = vld [vmem:[%s3 + $0x24] sm:$0xf]
    %v1584 = vld [vmem:[%s3 + $0x28] sm:$0xf]
    %v1585 = vld [vmem:[%s3 + $0x2c] sm:$0xf]
    %v1586 = vld [vmem:[%s3 + $0x30] sm:$0xf]
    %v1587 = vld [vmem:[%s3 + $0x34] sm:$0xf]
    %v1588 = vld [vmem:[%s3 + $0x38] sm:$0xf]
    %v1589 = vld [vmem:[%s3 + $0x3c] sm:$0xf]
    %v1590 = vld [vmem:[%s3 + $0x40] sm:$0xf]
    %v1591 = vld [vmem:[%s3 + $0x44] sm:$0xf]
    %v1592 = vld [vmem:[%s3 + $0x48] sm:$0xf]
    %v1593 = vld [vmem:[%s3 + $0x4c] sm:$0xf]
    %v1594 = vld [vmem:[%s3 + $0x50] sm:$0xf]
    %v1595 = vld [vmem:[%s3 + $0x54] sm:$0xf]
    %v1596 = vld [vmem:[%s3 + $0x58] sm:$0xf]
    %v1597 = vld [vmem:[%s3 + $0x5c] sm:$0xf]
    %v1598 = vld [vmem:[%s3 + $0x60] sm:$0xf]
    %v1599 = vld [vmem:[%s3 + $0x64] sm:$0xf]
    %v1600 = vld [vmem:[%s3 + $0x68] sm:$0xf]
    %v1601 = vld [vmem:[%s3 + $0x6c] sm:$0xf]
    %v1602 = vld [vmem:[%s3 + $0x70] sm:$0xf]
    %v1603 = vld [vmem:[%s3 + $0x74] sm:$0xf]
    %v1604 = vld [vmem:[%s3 + $0x78] sm:$0xf]
    %v1605 = vld [vmem:[%s3 + $0x7c] sm:$0xf]
    %v1606 = vld [vmem:[%s3 + $0x80] sm:$0xf]
    %v1607 = vld [vmem:[%s3 + $0x84] sm:$0xf]
    %v1608 = vld [vmem:[%s3 + $0x88] sm:$0xf]
    %v1609 = vld [vmem:[%s3 + $0x8c] sm:$0xf]
    %v1610 = vld [vmem:[%s3 + $0x90] sm:$0xf]
    %v1611 = vld [vmem:[%s3 + $0x94] sm:$0xf]
    %v1612 = vld [vmem:[%s3 + $0x98] sm:$0xf]
    %v1613 = vld [vmem:[%s3 + $0x9c] sm:$0xf]
    %v1614 = vld [vmem:[%s3 + $0xa0] sm:$0xf]
    %v1615 = vld [vmem:[%s3 + $0xa4] sm:$0xf]
    %v1616 = vld [vmem:[%s3 + $0xa8] sm:$0xf]
    %v1617 = vld [vmem:[%s3 + $0xac] sm:$0xf]
    %v1618 = vld [vmem:[%s3 + $0xb0] sm:$0xf]
    %v1619 = vld [vmem:[%s3 + $0xb4] sm:$0xf]
    %v1620 = vld [vmem:[%s3 + $0xb8] sm:$0xf]
    %v1621 = vld [vmem:[%s3 + $0xbc] sm:$0xf]
    %v1622 = vld [vmem:[%s3 + $0xc0] sm:$0x7]
    %v1623 = vld [vmem:[%s4] sm:$0x1]
    %v1625 = vlaneseq
    %v1626 = vshrl.u32 %v1625, 7
    %v1627 = vsub.s32 0, %v1626
    %v1628 = vrot.slane %v1623, %v1627
    %v1679 = vunpack.c.l.b16 %v1574
    %v1680 = vunpack.c.l.b16 %v1575
    %v1681 = vunpack.c.l.b16 %v1576
    %v1682 = vunpack.c.l.b16 %v1577
    %v1683 = vunpack.c.l.b16 %v1578
    %v1684 = vunpack.c.l.b16 %v1579
    %v1685 = vunpack.c.l.b16 %v1580
    %v1686 = vunpack.c.l.b16 %v1581
    %v1687 = vunpack.c.l.b16 %v1582
    %v1688 = vunpack.c.l.b16 %v1583
    %v1689 = vunpack.c.l.b16 %v1584
    %v1690 = vunpack.c.l.b16 %v1585
    %v1691 = vunpack.c.l.b16 %v1586
    %v1692 = vunpack.c.l.b16 %v1587
    %v1693 = vunpack.c.l.b16 %v1588
    %v1694 = vunpack.c.l.b16 %v1589
    %v1695 = vunpack.c.l.b16 %v1590
    %v1696 = vunpack.c.l.b16 %v1591
    %v1697 = vunpack.c.l.b16 %v1592
    %v1698 = vunpack.c.l.b16 %v1593
    %v1699 = vunpack.c.l.b16 %v1594
    %v1700 = vunpack.c.l.b16 %v1595
    %v1701 = vunpack.c.l.b16 %v1596
    %v1702 = vunpack.c.l.b16 %v1597
    %v1703 = vunpack.c.l.b16 %v1598
    %v1704 = vunpack.c.l.b16 %v1599
    %v1705 = vunpack.c.l.b16 %v1600
    %v1706 = vunpack.c.l.b16 %v1601
    %v1707 = vunpack.c.l.b16 %v1602
    %v1708 = vunpack.c.l.b16 %v1603
    %v1709 = vunpack.c.l.b16 %v1604
    %v1710 = vunpack.c.l.b16 %v1605
    %v1711 = vunpack.c.l.b16 %v1606
    %v1712 = vunpack.c.l.b16 %v1607
    %v1713 = vunpack.c.l.b16 %v1608
    %v1714 = vunpack.c.l.b16 %v1609
    %v1715 = vunpack.c.l.b16 %v1610
    %v1716 = vunpack.c.l.b16 %v1611
    %v1717 = vunpack.c.l.b16 %v1612
    %v1718 = vunpack.c.l.b16 %v1613
    %v1719 = vunpack.c.l.b16 %v1614
    %v1720 = vunpack.c.l.b16 %v1615
    %v1721 = vunpack.c.l.b16 %v1616
    %v1722 = vunpack.c.l.b16 %v1617
    %v1723 = vunpack.c.l.b16 %v1618
    %v1724 = vunpack.c.l.b16 %v1619
    %v1725 = vunpack.c.l.b16 %v1620
    %v1726 = vunpack.c.l.b16 %v1621
    %v1727 = vunpack.c.l.b16 %v1622
    %v1728 = vpack.c.b16 %v1680, %v1679
    %v1729 = vpack.c.b16 %v1682, %v1681
    %v1730 = vpack.c.b16 %v1684, %v1683
    %v1731 = vpack.c.b16 %v1686, %v1685
    %v1732 = vpack.c.b16 %v1688, %v1687
    %v1733 = vpack.c.b16 %v1690, %v1689
    %v1734 = vpack.c.b16 %v1692, %v1691
    %v1735 = vpack.c.b16 %v1694, %v1693
    %v1736 = vpack.c.b16 %v1696, %v1695
    %v1737 = vpack.c.b16 %v1698, %v1697
    %v1738 = vpack.c.b16 %v1700, %v1699
    %v1739 = vpack.c.b16 %v1702, %v1701
    %v1740 = vpack.c.b16 %v1704, %v1703
    %v1741 = vpack.c.b16 %v1706, %v1705
    %v1742 = vpack.c.b16 %v1708, %v1707
    %v1743 = vpack.c.b16 %v1710, %v1709
    %v1744 = vpack.c.b16 %v1712, %v1711
    %v1745 = vpack.c.b16 %v1714, %v1713
    %v1746 = vpack.c.b16 %v1716, %v1715
    %v1747 = vpack.c.b16 %v1718, %v1717
    %v1748 = vpack.c.b16 %v1720, %v1719
    %v1749 = vpack.c.b16 %v1722, %v1721
    %v1750 = vpack.c.b16 %v1724, %v1723
    %v1751 = vpack.c.b16 %v1726, %v1725
    %v1752 = vpack.c.b16 %v1727, %v1727
    %vm1777 = vcmask 48128
    %v1779 = vsel %vm1777, %v1573, 0
    %vm1781 = vcmask 1042432
    %v1783 = vsel %vm1781, %v1752, 0
    %1785 = vmatprep.subr.bf16.mxu0 0
    %1786 = vmatpush1.bf16.msra.mxu0 %v1735
    %1787 = vmatprep.subr.bf16.mxu0 0
    %1788 = vmatpush1.bf16.msra.mxu0 %v1734
    %1789 = vmatprep.subr.bf16.mxu0 0
    %1790 = vmatpush1.bf16.msra.mxu0 %v1733
    %1791 = vmatprep.subr.bf16.mxu0 0
    %1792 = vmatpush1.bf16.msra.mxu0 %v1732
    %1793 = vmatprep.subr.bf16.mxu0 0
    %1794 = vmatpush1.bf16.msra.mxu0 %v1731
    %1795 = vmatprep.subr.bf16.mxu0 0
    %1796 = vmatpush1.bf16.msra.mxu0 %v1730
    %1797 = vmatprep.subr.bf16.mxu0 0
    %1798 = vmatpush1.bf16.msra.mxu0 %v1729
    %1799 = vmatprep.subr.bf16.mxu0 0
    %1800 = vmatpush1.bf16.msra.mxu0 %v1728
    %1801 = vmatprep.subr.bf16.mxu0 0
    %1802 = vmatpush2.bf16.msra.mxu0 %v1743
    %1803 = vmatprep.subr.bf16.mxu0 0
    %1804 = vmatpush2.bf16.msra.mxu0 %v1742
    %1805 = vmatprep.subr.bf16.mxu0 0
    %1806 = vmatpush2.bf16.msra.mxu0 %v1741
    %1807 = vmatprep.subr.bf16.mxu0 0
    %1808 = vmatpush2.bf16.msra.mxu0 %v1740
    %1809 = vmatprep.subr.bf16.mxu0 0
    %1810 = vmatpush2.bf16.msra.mxu0 %v1739
    %1811 = vmatprep.subr.bf16.mxu0 0
    %1812 = vmatpush2.bf16.msra.mxu0 %v1738
    %1813 = vmatprep.subr.bf16.mxu0 0
    %1814 = vmatpush2.bf16.msra.mxu0 %v1737
    %1815 = vmatprep.subr.bf16.mxu0 0
    %1816 = vmatpush2.bf16.msra.mxu0 %v1736
    %1817 = vmatprep.mubr.bf16.mxu0 %v1571
    %1818 = vmatmul.mubr.bf16.gmra.mxu0 %v1570
    %v1819 = vpop.f32.mrf.mxu0
    %v1820 = vadd.f32 %v1628, %v1819
    %v1821 = vpop.f32.mrf.mxu0
    %v1822 = vpop.f32.mrf.mxu0
    %v1823 = vpop.f32.mrf.mxu0
    %1824 = vdwg.mxu0
    %1825 = vmatprep.subr.bf16.mxu0 0
    %1826 = vmatpush1.bf16.msra.mxu0 %v1751
    %1827 = vmatprep.subr.bf16.mxu0 0
    %1828 = vmatpush1.bf16.msra.mxu0 %v1750
    %1829 = vmatprep.subr.bf16.mxu0 0
    %1830 = vmatpush1.bf16.msra.mxu0 %v1749
    %1831 = vmatprep.subr.bf16.mxu0 0
    %1832 = vmatpush1.bf16.msra.mxu0 %v1748
    %1833 = vmatprep.subr.bf16.mxu0 0
    %1834 = vmatpush1.bf16.msra.mxu0 %v1747
    %1835 = vmatprep.subr.bf16.mxu0 0
    %1836 = vmatpush1.bf16.msra.mxu0 %v1746
    %1837 = vmatprep.subr.bf16.mxu0 0
    %1838 = vmatpush1.bf16.msra.mxu0 %v1745
    %1839 = vmatprep.subr.bf16.mxu0 0
    %1840 = vmatpush1.bf16.msra.mxu0 %v1744
    %1841 = vmatprep.subr.bf16.mxu0 0
    %1842 = vmatpush2.bf16.msra.mxu0 0
    %1843 = vmatprep.subr.bf16.mxu0 0
    %1844 = vmatpush2.bf16.msra.mxu0 0
    %1845 = vmatprep.subr.bf16.mxu0 0
    %1846 = vmatpush2.bf16.msra.mxu0 0
    %1847 = vmatprep.subr.bf16.mxu0 0
    %1848 = vmatpush2.bf16.msra.mxu0 0
    %1849 = vmatprep.subr.bf16.mxu0 0
    %1850 = vmatpush2.bf16.msra.mxu0 0
    %1851 = vmatprep.subr.bf16.mxu0 0
    %1852 = vmatpush2.bf16.msra.mxu0 0
    %1853 = vmatprep.subr.bf16.mxu0 0
    %1854 = vmatpush2.bf16.msra.mxu0 0
    %1855 = vmatprep.subr.bf16.mxu0 0
    %1856 = vmatpush2.bf16.msra.mxu0 %v1783
    %1857 = vmatprep.mubr.bf16.mxu0 %v1779
    %1858 = vmatmul.mubr.bf16.gmra.mxu0 %v1572
    %v1859 = vpop.f32.mrf.mxu0
    %v1860 = vadd.f32 %v1820, %v1859
    %v1861 = vpop.f32.mrf.mxu0
    %v1862 = vpop.f32.mrf.mxu0
    %v1863 = vpop.f32.mrf.mxu0
    %1864 = vdwg.mxu0
    %1865 = vmax.xlane.f32.xlu0 %v1860
    %v1866 = vpop.xlane.xlu0 %1865
    %v1867 = vsub.f32 %v1860, %v1866
    %v1868 = vmul.f32 %v1867, 1.442695
    %v1869 = vpow.pop %v1868
    %1870 = vadd.xlane.f32.xlu0 %v1869
    %v1871 = vpop.xlane.xlu0 %1870
    %v1872 = vlog2.pop %v1871
    %v1873 = vmul.f32 %v1872, 0.6931472
    %v1874 = vsub.f32 %v1867, %v1873
    %1875 = vst [vmem:[#allocation2] sm:$0xff] %v1874
    // Predicated region
    $region22: #{tpu_custom_call.1} parent=1 // pred_check
      _
    $region23: #{tpu_custom_call.1} parent=1 // pred_check_branch
      %1877 = sbr.rel (0) target = $region25
    $region24: #{tpu_custom_call.1} parent=1 // pred_region
      %s1879 = ssub.s32 128, 128
      %1880 = vsyncadd [#allocation3], %s1879
      %s1882 = sshll.u32 [#allocation2], 4
      %s1883 = int_to_ptr.vmem [resolvable:$true] %s1882
      %1885 = dma.vmem_to_hbm [thread:$0]  %s1883, 128, %s5, [#allocation3]
    $region25: #{tpu_custom_call.1} parent=1 // pred_fallthru
      _
    // Predicated region
    $region26: #{tpu_custom_call.1} parent=1 // pred_check
      _
    $region27: #{tpu_custom_call.1} parent=1 // pred_check_branch
      %1887 = sbr.rel (0) target = $region29
    $region28: #{tpu_custom_call.1} parent=1 // pred_region
      %1888 = dma.done [#allocation3], 128
    $region29: #{tpu_custom_call.1} parent=1 // pred_fallthru
      _
    %1889 = vsyncpa [#allocation3], 1

</llo_original>
